<compile_context>
chip_gen: v5e
topology: v5e:2x2
jax: 0.10.0
libtpu: 0.0.40
codegen_flags: <defaults>
</compile_context>

<pallas_src>
import functools
import math
import numpy as np

import jax
import jax.numpy as jnp
from jax.experimental import pallas as pl
from jax.experimental.pallas import tpu as pltpu


def _round_up(x, m):
    return ((x + m - 1) // m) * m


def _propagate_kernel(a_ref, h_ref, s_ref, h_out_ref, s_out_ref, acc_ref):
    """One HyperConv layer for one (row-tile, k-tile) grid step.

    a_ref:     (tm, tk)  adjacency tile
    h_ref:     (tk, D)   current embeddings, rows of the reduction slice
    s_ref:     (tm, D)   running layer-sum, rows of this output tile
    h_out_ref: (tm, D)   A @ H for this row tile
    s_out_ref: (tm, D)   S + A @ H for this row tile
    acc_ref:   (tm, D)   f32 VMEM accumulator (persists across the k axis)
    """
    k = pl.program_id(1)

    @pl.when(k == 0)
    def _():
        acc_ref[...] = jnp.zeros_like(acc_ref)

    # MXU matmul, f32 accumulation; no operand transposes needed.
    acc_ref[...] += jnp.dot(
        a_ref[...], h_ref[...], preferred_element_type=jnp.float32
    )

    @pl.when(k == pl.num_programs(1) - 1)
    def _():
        h_next = acc_ref[...]
        h_out_ref[...] = h_next.astype(h_out_ref.dtype)
        # Fused layer-sum epilogue: S_next = S + A @ H.
        s_out_ref[...] = (s_ref[...].astype(jnp.float32) + h_next).astype(
            s_out_ref.dtype
        )


def _propagate_layer(a, h, s, *, tm, tk):
    """One call of H_next = A @ H, S_next = S + H_next (all padded & aligned)."""
    n = a.shape[0]
    d = h.shape[1]
    grid = (n // tm, n // tk)

    return pl.pallas_call(
        _propagate_kernel,
        out_shape=(
            jax.ShapeDtypeStruct((n, d), h.dtype),
            jax.ShapeDtypeStruct((n, d), s.dtype),
        ),
        grid_spec=pltpu.PrefetchScalarGridSpec(
            num_scalar_prefetch=0,
            grid=grid,
            in_specs=[
                pl.BlockSpec((tm, tk), lambda i, k: (i, k)),  # A tile
                pl.BlockSpec((tk, d), lambda i, k: (k, 0)),   # H rows (reduction)
                pl.BlockSpec((tm, d), lambda i, k: (i, 0)),   # S rows (this tile)
            ],
            out_specs=[
                pl.BlockSpec((tm, d), lambda i, k: (i, 0)),   # H_next rows
                pl.BlockSpec((tm, d), lambda i, k: (i, 0)),   # S_next rows
            ],
            scratch_shapes=[pltpu.VMEM((tm, d), jnp.float32)],
        ),
        compiler_params=pltpu.CompilerParams(
            # Row tiles are independent -> megacore-shardable; k is the reduction.
            dimension_semantics=("parallel", "arbitrary"),
            # Safe on all of v5e/v6e/v7x; tiles here use < 1 MiB anyway.
            vmem_limit_bytes=32 * 1024 * 1024,
        ),
    )(a, h, s)


@functools.partial(jax.jit, static_argnames=("layers", "tile"))
def _hyperconv_propagate(a_p, e_p, layers, tile):
    tm = tk = min(tile, a_p.shape[0])
    h = e_p       # H_0
    s = e_p       # running sum, seeded with the layer-0 term
    for _ in range(layers):
        h, s = _propagate_layer(a_p, h, s, tm=tm, tk=tk)
    return s


def hyperconv_forward(adj_values, adj_row, adj_col, adj_shape, embedding,
                      layers, dataset="sample", *, tile=128):
    """Faithful port of HyperConv.forward (sparse adjacency given in COO form)."""
    # ---- wrapper-side sparse preprocessing (mirrors the torch.sparse setup) ----
    values = np.asarray(adj_values, dtype=np.float32)
    rows = np.asarray(adj_row)
    cols = np.asarray(adj_col)
    if dataset == "Nowplaying":
        keep = values >= 0.05
        values, rows, cols = values[keep], rows[keep], cols[keep]

    n_rows, n_cols = adj_shape
    assert n_rows == n_cols, "HyperConv adjacency is square (item-item)"
    a = np.zeros((n_rows, n_cols), dtype=np.float32)
    np.add.at(a, (rows, cols), values)  # COO -> dense (duplicate coords sum)

    n, d = embedding.shape
    assert n == n_cols, "embedding rows must match adjacency columns"

    # Lane-dense, (8,128)-aligned padding. Zero padding is exact: padded rows /
    # cols contribute nothing and are sliced off at the end.
    n_pad = _round_up(max(n_rows, tile), tile)
    d_pad = _round_up(max(d, 128), 128)
    a_p = jnp.zeros((n_pad, n_pad), jnp.float32).at[:n_rows, :n_cols].set(
        jnp.asarray(a)
    )
    e_p = jnp.zeros((n_pad, d_pad), jnp.float32).at[:n, :d].set(
        jnp.asarray(embedding, dtype=jnp.float32)
    )

    s_p = _hyperconv_propagate(a_p, e_p, layers, tile)
    return s_p[:n, :d]


def reference_hyperconv(a_dense, embedding, layers):
    h = embedding
    final = [h]
    for _ in range(layers):
        h = jnp.dot(a_dense, h)
        final.append(h)
    return sum(final)


if __name__ == "__main__":
    # Small shapes consistent with the module: a 200-node item graph with ~5%
    # dense adjacency, emb_size=100 (the module default), layers=3.
    n_nodes, emb_size, layers = 200, 100, 3

    key = jax.random.PRNGKey(0)
    k_val, k_mask, k_emb = jax.random.split(key, 3)

    # Build a sparse random adjacency in COO form (as scipy.coo_matrix would give).
    dense_weights = jax.random.uniform(k_val, (n_nodes, n_nodes), jnp.float32)
    keep_mask = jax.random.uniform(k_mask, (n_nodes, n_nodes), jnp.float32) < 0.05
    a_np = np.asarray(jnp.where(keep_mask, dense_weights, 0.0))
    coo_row, coo_col = np.nonzero(a_np)
    coo_val = a_np[coo_row, coo_col]

    embedding = jax.random.normal(k_emb, (n_nodes, emb_size), dtype=jnp.float32)

    out = hyperconv_forward(
        coo_val, coo_row, coo_col, (n_nodes, n_nodes), embedding, layers,
        dataset="sample",
    )
    out = jax.block_until_ready(out)

    ref = reference_hyperconv(jnp.asarray(a_np), embedding, layers)
    assert out.shape == (n_nodes, emb_size)
    assert jnp.allclose(out, ref, atol=1e-3, rtol=1e-4), "mismatch vs reference"

    print("KERNEL_OK")
</pallas_src>

<mosaic_0001>
module attributes {stable_mosaic.version = 11 : i64} {
  func.func @_propagate_kernel(%arg0: i32, %arg1: i32, %arg2: memref<128x128xf32, #tpu.memory_space<vmem>>, %arg3: memref<128x128xf32, #tpu.memory_space<vmem>>, %arg4: memref<128x128xf32, #tpu.memory_space<vmem>>, %arg5: memref<128x128xf32, #tpu.memory_space<vmem>>, %arg6: memref<128x128xf32, #tpu.memory_space<vmem>>, %arg7: memref<128x128xf32, #tpu.memory_space<vmem>>) attributes {dimension_semantics = [#tpu.dimension_semantics<parallel>, #tpu.dimension_semantics<arbitrary>], iteration_bounds = array<i64: 2, 2>, scalar_prefetch = 0 : i64, scratch_operands = 1 : i64, tpu.core_type = #tpu.core_type<tc>, window_params = [{transform_indices = @transform_0, window_bounds = array<i64: 128, 128>}, {transform_indices = @transform_1, window_bounds = array<i64: 128, 128>}, {transform_indices = @transform_2, window_bounds = array<i64: 128, 128>}, {transform_indices = @transform_3, window_bounds = array<i64: 128, 128>}, {transform_indices = @transform_4, window_bounds = array<i64: 128, 128>}]} {
    %c0_i32 = arith.constant 0 : i32
    %0 = arith.cmpi eq, %arg1, %c0_i32 : i32
    %1 = arith.extui %0 : i1 to i32
    %c0_i32_0 = arith.constant 0 : i32
    %2 = arith.cmpi ne, %1, %c0_i32_0 : i32
    scf.if %2 {
      %cst_9 = arith.constant 0.000000e+00 : f32
      %12 = vector.broadcast %cst_9 : f32 to vector<128x128xf32>
      %c0_10 = arith.constant 0 : index
      %c0_11 = arith.constant 0 : index
      %13 = vector.load %arg7[%c0_10, %c0_11] : memref<128x128xf32, #tpu.memory_space<vmem>>, vector<128x128xf32>
      tpu.vector_store %arg7[%c0_10, %c0_11], %12 {strides = array<i32>} : memref<128x128xf32, #tpu.memory_space<vmem>>, vector<128x128xf32>,
    } else {
    }
    %c0 = arith.constant 0 : index
    %c0_1 = arith.constant 0 : index
    %3 = vector.load %arg7[%c0, %c0_1] : memref<128x128xf32, #tpu.memory_space<vmem>>, vector<128x128xf32>
    %c0_2 = arith.constant 0 : index
    %c0_3 = arith.constant 0 : index
    %4 = vector.load %arg2[%c0_2, %c0_3] : memref<128x128xf32, #tpu.memory_space<vmem>>, vector<128x128xf32>
    %c0_4 = arith.constant 0 : index
    %c0_5 = arith.constant 0 : index
    %5 = vector.load %arg3[%c0_4, %c0_5] : memref<128x128xf32, #tpu.memory_space<vmem>>, vector<128x128xf32>
    %cst = arith.constant dense<0.000000e+00> : vector<128x128xf32>
    %6 = tpu.matmul %4, %5, %cst {dimension_numbers = #tpu.dot_dimension_numbers<[1], [0], [0], [1], [0, 0, 1, 1], [], []>} : vector<128x128xf32>, vector<128x128xf32>, vector<128x128xf32> -> vector<128x128xf32>
    %7 = arith.addf %3, %6 : vector<128x128xf32>
    %c0_6 = arith.constant 0 : index
    %c0_7 = arith.constant 0 : index
    %8 = vector.load %arg7[%c0_6, %c0_7] : memref<128x128xf32, #tpu.memory_space<vmem>>, vector<128x128xf32>
    tpu.vector_store %arg7[%c0_6, %c0_7], %7 {strides = array<i32>} : memref<128x128xf32, #tpu.memory_space<vmem>>, vector<128x128xf32>,
    %c1_i32 = arith.constant 1 : i32
    %9 = arith.cmpi eq, %arg1, %c1_i32 : i32
    %10 = arith.extui %9 : i1 to i32
    %c0_i32_8 = arith.constant 0 : i32
    %11 = arith.cmpi ne, %10, %c0_i32_8 : i32
    scf.if %11 {
      %c0_9 = arith.constant 0 : index
      %c0_10 = arith.constant 0 : index
      %12 = vector.load %arg7[%c0_9, %c0_10] : memref<128x128xf32, #tpu.memory_space<vmem>>, vector<128x128xf32>
      %c0_11 = arith.constant 0 : index
      %c0_12 = arith.constant 0 : index
      %13 = vector.load %arg5[%c0_11, %c0_12] : memref<128x128xf32, #tpu.memory_space<vmem>>, vector<128x128xf32>
      tpu.vector_store %arg5[%c0_11, %c0_12], %12 {strides = array<i32>} : memref<128x128xf32, #tpu.memory_space<vmem>>, vector<128x128xf32>,
      %c0_13 = arith.constant 0 : index
      %c0_14 = arith.constant 0 : index
      %14 = vector.load %arg4[%c0_13, %c0_14] : memref<128x128xf32, #tpu.memory_space<vmem>>, vector<128x128xf32>
      %15 = arith.addf %14, %12 : vector<128x128xf32>
      %c0_15 = arith.constant 0 : index
      %c0_16 = arith.constant 0 : index
      %16 = vector.load %arg6[%c0_15, %c0_16] : memref<128x128xf32, #tpu.memory_space<vmem>>, vector<128x128xf32>
      tpu.vector_store %arg6[%c0_15, %c0_16], %15 {strides = array<i32>} : memref<128x128xf32, #tpu.memory_space<vmem>>, vector<128x128xf32>,
    } else {
    }
    return
  }
  func.func @transform_0(%arg0: i32, %arg1: i32) -> (i32, i32) {
    %c0_i32 = arith.constant 0 : i32
    return %arg0, %arg1 : i32, i32
  }
  func.func @transform_1(%arg0: i32, %arg1: i32) -> (i32, i32) {
    %c0_i32 = arith.constant 0 : i32
    %c0_i32_0 = arith.constant 0 : i32
    return %arg1, %c0_i32 : i32, i32
  }
  func.func @transform_2(%arg0: i32, %arg1: i32) -> (i32, i32) {
    %c0_i32 = arith.constant 0 : i32
    %c0_i32_0 = arith.constant 0 : i32
    return %arg0, %c0_i32 : i32, i32
  }
  func.func @transform_3(%arg0: i32, %arg1: i32) -> (i32, i32) {
    %c0_i32 = arith.constant 0 : i32
    %c0_i32_0 = arith.constant 0 : i32
    return %arg0, %c0_i32 : i32, i32
  }
  func.func @transform_4(%arg0: i32, %arg1: i32) -> (i32, i32) {
    %c0_i32 = arith.constant 0 : i32
    %c0_i32_0 = arith.constant 0 : i32
    return %arg0, %c0_i32 : i32, i32
  }
}

module attributes {stable_mosaic.version = 11 : i64} {
  func.func @_propagate_kernel(%arg0: i32, %arg1: i32, %arg2: memref<128x128xf32, #tpu.memory_space<vmem>>, %arg3: memref<128x128xf32, #tpu.memory_space<vmem>>, %arg4: memref<128x128xf32, #tpu.memory_space<vmem>>, %arg5: memref<128x128xf32, #tpu.memory_space<vmem>>, %arg6: memref<128x128xf32, #tpu.memory_space<vmem>>, %arg7: memref<128x128xf32, #tpu.memory_space<vmem>>) attributes {dimension_semantics = [#tpu.dimension_semantics<parallel>, #tpu.dimension_semantics<arbitrary>], iteration_bounds = array<i64: 2, 2>, scalar_prefetch = 0 : i64, scratch_operands = 1 : i64, tpu.core_type = #tpu.core_type<tc>, window_params = [{transform_indices = @transform_0, window_bounds = array<i64: 128, 128>}, {transform_indices = @transform_1, window_bounds = array<i64: 128, 128>}, {transform_indices = @transform_2, window_bounds = array<i64: 128, 128>}, {transform_indices = @transform_3, window_bounds = array<i64: 128, 128>}, {transform_indices = @transform_4, window_bounds = array<i64: 128, 128>}]} {
    %c0_i32 = arith.constant 0 : i32
    %0 = arith.cmpi eq, %arg1, %c0_i32 : i32
    %1 = arith.extui %0 : i1 to i32
    %c0_i32_0 = arith.constant 0 : i32
    %2 = arith.cmpi ne, %1, %c0_i32_0 : i32
    scf.if %2 {
      %cst_9 = arith.constant 0.000000e+00 : f32
      %12 = vector.broadcast %cst_9 : f32 to vector<128x128xf32>
      %c0_10 = arith.constant 0 : index
      %c0_11 = arith.constant 0 : index
      %13 = vector.load %arg7[%c0_10, %c0_11] : memref<128x128xf32, #tpu.memory_space<vmem>>, vector<128x128xf32>
      tpu.vector_store %arg7[%c0_10, %c0_11], %12 {strides = array<i32>} : memref<128x128xf32, #tpu.memory_space<vmem>>, vector<128x128xf32>,
    } else {
    }
    %c0 = arith.constant 0 : index
    %c0_1 = arith.constant 0 : index
    %3 = vector.load %arg7[%c0, %c0_1] : memref<128x128xf32, #tpu.memory_space<vmem>>, vector<128x128xf32>
    %c0_2 = arith.constant 0 : index
    %c0_3 = arith.constant 0 : index
    %4 = vector.load %arg2[%c0_2, %c0_3] : memref<128x128xf32, #tpu.memory_space<vmem>>, vector<128x128xf32>
    %c0_4 = arith.constant 0 : index
    %c0_5 = arith.constant 0 : index
    %5 = vector.load %arg3[%c0_4, %c0_5] : memref<128x128xf32, #tpu.memory_space<vmem>>, vector<128x128xf32>
    %cst = arith.constant dense<0.000000e+00> : vector<128x128xf32>
    %6 = tpu.matmul %4, %5, %cst {dimension_numbers = #tpu.dot_dimension_numbers<[1], [0], [0], [1], [0, 0, 1, 1], [], []>} : vector<128x128xf32>, vector<128x128xf32>, vector<128x128xf32> -> vector<128x128xf32>
    %7 = arith.addf %3, %6 : vector<128x128xf32>
    %c0_6 = arith.constant 0 : index
    %c0_7 = arith.constant 0 : index
    %8 = vector.load %arg7[%c0_6, %c0_7] : memref<128x128xf32, #tpu.memory_space<vmem>>, vector<128x128xf32>
    tpu.vector_store %arg7[%c0_6, %c0_7], %7 {strides = array<i32>} : memref<128x128xf32, #tpu.memory_space<vmem>>, vector<128x128xf32>,
    %c1_i32 = arith.constant 1 : i32
    %9 = arith.cmpi eq, %arg1, %c1_i32 : i32
    %10 = arith.extui %9 : i1 to i32
    %c0_i32_8 = arith.constant 0 : i32
    %11 = arith.cmpi ne, %10, %c0_i32_8 : i32
    scf.if %11 {
      %c0_9 = arith.constant 0 : index
      %c0_10 = arith.constant 0 : index
      %12 = vector.load %arg7[%c0_9, %c0_10] : memref<128x128xf32, #tpu.memory_space<vmem>>, vector<128x128xf32>
      %c0_11 = arith.constant 0 : index
      %c0_12 = arith.constant 0 : index
      %13 = vector.load %arg5[%c0_11, %c0_12] : memref<128x128xf32, #tpu.memory_space<vmem>>, vector<128x128xf32>
      tpu.vector_store %arg5[%c0_11, %c0_12], %12 {strides = array<i32>} : memref<128x128xf32, #tpu.memory_space<vmem>>, vector<128x128xf32>,
      %c0_13 = arith.constant 0 : index
      %c0_14 = arith.constant 0 : index
      %14 = vector.load %arg4[%c0_13, %c0_14] : memref<128x128xf32, #tpu.memory_space<vmem>>, vector<128x128xf32>
      %15 = arith.addf %14, %12 : vector<128x128xf32>
      %c0_15 = arith.constant 0 : index
      %c0_16 = arith.constant 0 : index
      %16 = vector.load %arg6[%c0_15, %c0_16] : memref<128x128xf32, #tpu.memory_space<vmem>>, vector<128x128xf32>
      tpu.vector_store %arg6[%c0_15, %c0_16], %15 {strides = array<i32>} : memref<128x128xf32, #tpu.memory_space<vmem>>, vector<128x128xf32>,
    } else {
    }
    return
  }
  func.func @transform_0(%arg0: i32, %arg1: i32) -> (i32, i32) {
    %c0_i32 = arith.constant 0 : i32
    return %arg0, %arg1 : i32, i32
  }
  func.func @transform_1(%arg0: i32, %arg1: i32) -> (i32, i32) {
    %c0_i32 = arith.constant 0 : i32
    %c0_i32_0 = arith.constant 0 : i32
    return %arg1, %c0_i32 : i32, i32
  }
  func.func @transform_2(%arg0: i32, %arg1: i32) -> (i32, i32) {
    %c0_i32 = arith.constant 0 : i32
    %c0_i32_0 = arith.constant 0 : i32
    return %arg0, %c0_i32 : i32, i32
  }
  func.func @transform_3(%arg0: i32, %arg1: i32) -> (i32, i32) {
    %c0_i32 = arith.constant 0 : i32
    %c0_i32_0 = arith.constant 0 : i32
    return %arg0, %c0_i32 : i32, i32
  }
  func.func @transform_4(%arg0: i32, %arg1: i32) -> (i32, i32) {
    %c0_i32 = arith.constant 0 : i32
    %c0_i32_0 = arith.constant 0 : i32
    return %arg0, %c0_i32 : i32, i32
  }
}

module attributes {stable_mosaic.version = 11 : i64} {
  func.func @_propagate_kernel(%arg0: i32, %arg1: i32, %arg2: memref<128x128xf32, #tpu.memory_space<vmem>>, %arg3: memref<128x128xf32, #tpu.memory_space<vmem>>, %arg4: memref<128x128xf32, #tpu.memory_space<vmem>>, %arg5: memref<128x128xf32, #tpu.memory_space<vmem>>, %arg6: memref<128x128xf32, #tpu.memory_space<vmem>>, %arg7: memref<128x128xf32, #tpu.memory_space<vmem>>) attributes {dimension_semantics = [#tpu.dimension_semantics<parallel>, #tpu.dimension_semantics<arbitrary>], iteration_bounds = array<i64: 2, 2>, scalar_prefetch = 0 : i64, scratch_operands = 1 : i64, tpu.core_type = #tpu.core_type<tc>, window_params = [{transform_indices = @transform_0, window_bounds = array<i64: 128, 128>}, {transform_indices = @transform_1, window_bounds = array<i64: 128, 128>}, {transform_indices = @transform_2, window_bounds = array<i64: 128, 128>}, {transform_indices = @transform_3, window_bounds = array<i64: 128, 128>}, {transform_indices = @transform_4, window_bounds = array<i64: 128, 128>}]} {
    %c0_i32 = arith.constant 0 : i32
    %0 = arith.cmpi eq, %arg1, %c0_i32 : i32
    %1 = arith.extui %0 : i1 to i32
    %c0_i32_0 = arith.constant 0 : i32
    %2 = arith.cmpi ne, %1, %c0_i32_0 : i32
    scf.if %2 {
      %cst_9 = arith.constant 0.000000e+00 : f32
      %12 = vector.broadcast %cst_9 : f32 to vector<128x128xf32>
      %c0_10 = arith.constant 0 : index
      %c0_11 = arith.constant 0 : index
      %13 = vector.load %arg7[%c0_10, %c0_11] : memref<128x128xf32, #tpu.memory_space<vmem>>, vector<128x128xf32>
      tpu.vector_store %arg7[%c0_10, %c0_11], %12 {strides = array<i32>} : memref<128x128xf32, #tpu.memory_space<vmem>>, vector<128x128xf32>,
    } else {
    }
    %c0 = arith.constant 0 : index
    %c0_1 = arith.constant 0 : index
    %3 = vector.load %arg7[%c0, %c0_1] : memref<128x128xf32, #tpu.memory_space<vmem>>, vector<128x128xf32>
    %c0_2 = arith.constant 0 : index
    %c0_3 = arith.constant 0 : index
    %4 = vector.load %arg2[%c0_2, %c0_3] : memref<128x128xf32, #tpu.memory_space<vmem>>, vector<128x128xf32>
    %c0_4 = arith.constant 0 : index
    %c0_5 = arith.constant 0 : index
    %5 = vector.load %arg3[%c0_4, %c0_5] : memref<128x128xf32, #tpu.memory_space<vmem>>, vector<128x128xf32>
    %cst = arith.constant dense<0.000000e+00> : vector<128x128xf32>
    %6 = tpu.matmul %4, %5, %cst {dimension_numbers = #tpu.dot_dimension_numbers<[1], [0], [0], [1], [0, 0, 1, 1], [], []>} : vector<128x128xf32>, vector<128x128xf32>, vector<128x128xf32> -> vector<128x128xf32>
    %7 = arith.addf %3, %6 : vector<128x128xf32>
    %c0_6 = arith.constant 0 : index
    %c0_7 = arith.constant 0 : index
    %8 = vector.load %arg7[%c0_6, %c0_7] : memref<128x128xf32, #tpu.memory_space<vmem>>, vector<128x128xf32>
    tpu.vector_store %arg7[%c0_6, %c0_7], %7 {strides = array<i32>} : memref<128x128xf32, #tpu.memory_space<vmem>>, vector<128x128xf32>,
    %c1_i32 = arith.constant 1 : i32
    %9 = arith.cmpi eq, %arg1, %c1_i32 : i32
    %10 = arith.extui %9 : i1 to i32
    %c0_i32_8 = arith.constant 0 : i32
    %11 = arith.cmpi ne, %10, %c0_i32_8 : i32
    scf.if %11 {
      %c0_9 = arith.constant 0 : index
      %c0_10 = arith.constant 0 : index
      %12 = vector.load %arg7[%c0_9, %c0_10] : memref<128x128xf32, #tpu.memory_space<vmem>>, vector<128x128xf32>
      %c0_11 = arith.constant 0 : index
      %c0_12 = arith.constant 0 : index
      %13 = vector.load %arg5[%c0_11, %c0_12] : memref<128x128xf32, #tpu.memory_space<vmem>>, vector<128x128xf32>
      tpu.vector_store %arg5[%c0_11, %c0_12], %12 {strides = array<i32>} : memref<128x128xf32, #tpu.memory_space<vmem>>, vector<128x128xf32>,
      %c0_13 = arith.constant 0 : index
      %c0_14 = arith.constant 0 : index
      %14 = vector.load %arg4[%c0_13, %c0_14] : memref<128x128xf32, #tpu.memory_space<vmem>>, vector<128x128xf32>
      %15 = arith.addf %14, %12 : vector<128x128xf32>
      %c0_15 = arith.constant 0 : index
      %c0_16 = arith.constant 0 : index
      %16 = vector.load %arg6[%c0_15, %c0_16] : memref<128x128xf32, #tpu.memory_space<vmem>>, vector<128x128xf32>
      tpu.vector_store %arg6[%c0_15, %c0_16], %15 {strides = array<i32>} : memref<128x128xf32, #tpu.memory_space<vmem>>, vector<128x128xf32>,
    } else {
    }
    return
  }
  func.func @transform_0(%arg0: i32, %arg1: i32) -> (i32, i32) {
    %c0_i32 = arith.constant 0 : i32
    return %arg0, %arg1 : i32, i32
  }
  func.func @transform_1(%arg0: i32, %arg1: i32) -> (i32, i32) {
    %c0_i32 = arith.constant 0 : i32
    %c0_i32_0 = arith.constant 0 : i32
    return %arg1, %c0_i32 : i32, i32
  }
  func.func @transform_2(%arg0: i32, %arg1: i32) -> (i32, i32) {
    %c0_i32 = arith.constant 0 : i32
    %c0_i32_0 = arith.constant 0 : i32
    return %arg0, %c0_i32 : i32, i32
  }
  func.func @transform_3(%arg0: i32, %arg1: i32) -> (i32, i32) {
    %c0_i32 = arith.constant 0 : i32
    %c0_i32_0 = arith.constant 0 : i32
    return %arg0, %c0_i32 : i32, i32
  }
  func.func @transform_4(%arg0: i32, %arg1: i32) -> (i32, i32) {
    %c0_i32 = arith.constant 0 : i32
    %c0_i32_0 = arith.constant 0 : i32
    return %arg0, %c0_i32 : i32, i32
  }
}

</mosaic_0001>

<llo_original>
// kernel: _hyperconv_propagate.3
$region0: #{_hyperconv_propagate.3}
  #allocation0 [shape = 'u32[]', space=smem, size = 0x4, offset = 0x4, fixed_abs, tag = 'smem constant byte address 0x4 - core index']
  #allocation1 [shape = 'u32[72,128]{1,0:T(1,128)}', space=vmem, size = 0x9000, scoped, tag = 'internal scratch']
  #allocation2 [shape = 'f32[128,128]{1,0:T(8,128)}', space=vmem, size = 0x10000, scoped, tag = 'scratch operand']
  %s0 = inlined_call_operand.hbm [shape: f32[256,256], index: 0, kind: input, shape index: {}]
  %s1 = inlined_call_operand.hbm [shape: f32[256,128], index: 1, kind: input, shape index: {}, may-alias: {1,2}]
  %s2 = inlined_call_operand.hbm [shape: f32[256,128], index: 2, kind: input, shape index: {}, may-alias: {1,2}]
  %s3 = inlined_call_operand.vmem [shape: f32[256,128], index: 3, kind: output, shape index: {0}]
  %s4 = inlined_call_operand.vmem [shape: f32[256,128], index: 4, kind: output, shape index: {1}]
  %5 = xla_tuple %s3, %s4
  %s6 = sld [smem:[#allocation0]]
  $region73: #{_hyperconv_propagate.3} parent=0
    _
  %s8 = ssub.s32 1, %s6
  %s9 = scalar_select 0, %s8, %s6
  $region1: #{_hyperconv_propagate.3} parent=0
    #allocation3 [shape = 'u8[131072]{0}', space=vmem, size = 0x20000, scoped, tag = 'input window, operand 0']
    #allocation4 [shape = 's32[2]{0}', space=sflag, size = 0x8, scoped, tag = 'scoped memory for _hyperconv_propagate.3']
    #allocation5 [shape = 'u8[131072]{0}', space=vmem, size = 0x20000, scoped, tag = 'input window, operand 1']
    #allocation6 [shape = 's32[2]{0}', space=sflag, size = 0x8, scoped, tag = 'scoped memory for _hyperconv_propagate.3']
    #allocation7 [shape = 'u8[131072]{0}', space=vmem, size = 0x20000, scoped, tag = 'input window, operand 2']
    %10 = vsyncpa [#allocation4], 0
    %s11 = scalar_lea.sflag [#allocation4], 1
    %12 = vsyncpa %s11, 0
    %13 = vsyncpa [#allocation6], 0
    %s14 = scalar_lea.sflag [#allocation6], 1
    %15 = vsyncpa %s14, 0
    loop: start=0, step=1, limit=6
    $region2: #{_hyperconv_propagate.3} parent=1 // loop_pre_header
      _
    $region3: #{_hyperconv_propagate.3} parent=1 // loop_header
      %s17 = sphi 0, %s21
      %p18 = scmp.ge.s32.totalorder %s17, 6
      %s24 = sphi 0, %s36
      %s25 = sphi 0, %s32
      %s26 = sphi 0, %s24
      %s27 = sphi 0, %s25
      %s28 = sphi 0, %s26
      %s29 = sphi 0, %s27
      %s41 = sphi 0, %s43
      %s44 = sphi 0, %s41
      %s45 = sphi 0, %s44
      %s61 = sphi 0, %s45
      %s67 = sphi 0, %s69
      %s70 = sphi 0, %s67
      %s71 = sphi 0, %s70
      %s87 = sphi 0, %s71
      %s93 = sphi 0, %s95
      %s96 = sphi 0, %s93
      %s97 = sphi 0, %s96
      %s113 = sphi 0, %s97
      %s119 = sphi 0, %s121
      %s122 = sphi 0, %s119
      %s123 = sphi 0, %s122
      %s139 = sphi 0, %s123
      %s145 = sphi 0, %s147
      %s148 = sphi 0, %s145
      %s149 = sphi 0, %s148
      %s165 = sphi 0, %s149
    $region4: #{_hyperconv_propagate.3} parent=1 // loop_header_branch
      %20 = sbr.rel (%p18) target = $region8
    $region5: #{_hyperconv_propagate.3} parent=1 // loop_body
      %s22 = ssub.s32 %s17, 1
      %s23 = ssub.s32 %s17, 2
      %s30 = sadd.s32 1, %s25
      %p31 = scmp.ge.s32.totalorder %s30, 2
      %s32 = scalar_select %p31, 0, %s30
      %s33 = sadd.s32 1, %s24
      %s34 = scalar_select %p31, %s33, %s24
      %p35 = scmp.ge.s32.totalorder %s34, 2
      %s36 = scalar_select %p35, 0, %s34
      %s37 = ssub.s32 %s24, %s36
      %s38 = ssub.s32 %s25, %s32
      %s39 = sor.u32 %s37, %s38
      %p40 = scmp.eq.s32.totalorder %s39, 0
      %s42 = sadd.s32 %s41, 1
      %s43 = scalar_select %p40, %s41, %s42
      %p46 = pneg %p40
      %p47 = scmp.eq.s32.totalorder %s17, 3
      %p48 = por %p46, %p47
      %p49 = scmp.ne.s32.totalorder %s41, %s44
      %p50 = scmp.eq.s32.totalorder %s17, 0
      %p51 = por %p49, %p50
      %p52 = scmp.ne.s32.totalorder %s41, %s44
      %p53 = scmp.eq.s32.totalorder %s22, 3
      %p54 = por %p52, %p53
      %p55 = scmp.ne.s32.totalorder %s44, %s45
      %p56 = scmp.eq.s32.totalorder %s22, 0
      %p57 = por %p55, %p56
      %p58 = scmp.ne.s32.totalorder %s44, %s45
      %p59 = scmp.eq.s32.totalorder %s23, 3
      %p60 = por %p58, %p59
      %p62 = scmp.ne.s32.totalorder %s45, %s61
      %p63 = scmp.eq.s32.totalorder %s23, 0
      %p64 = por %p62, %p63
      %s65 = ssub.s32 %s25, %s32
      %p66 = scmp.eq.s32.totalorder %s65, 0
      %s68 = sadd.s32 %s67, 1
      %s69 = scalar_select %p66, %s67, %s68
      %p72 = pneg %p66
      %p73 = scmp.eq.s32.totalorder %s17, 3
      %p74 = por %p72, %p73
      %p75 = scmp.ne.s32.totalorder %s67, %s70
      %p76 = scmp.eq.s32.totalorder %s17, 0
      %p77 = por %p75, %p76
      %p78 = scmp.ne.s32.totalorder %s67, %s70
      %p79 = scmp.eq.s32.totalorder %s22, 3
      %p80 = por %p78, %p79
      %p81 = scmp.ne.s32.totalorder %s70, %s71
      %p82 = scmp.eq.s32.totalorder %s22, 0
      %p83 = por %p81, %p82
      %p84 = scmp.ne.s32.totalorder %s70, %s71
      %p85 = scmp.eq.s32.totalorder %s23, 3
      %p86 = por %p84, %p85
      %p88 = scmp.ne.s32.totalorder %s71, %s87
      %p89 = scmp.eq.s32.totalorder %s23, 0
      %p90 = por %p88, %p89
      %s91 = ssub.s32 %s24, %s36
      %p92 = scmp.eq.s32.totalorder %s91, 0
      %s94 = sadd.s32 %s93, 1
      %s95 = scalar_select %p92, %s93, %s94
      %p98 = pneg %p92
      %p99 = scmp.eq.s32.totalorder %s17, 3
      %p100 = por %p98, %p99
      %p101 = scmp.ne.s32.totalorder %s93, %s96
      %p102 = scmp.eq.s32.totalorder %s17, 0
      %p103 = por %p101, %p102
      %p104 = scmp.ne.s32.totalorder %s93, %s96
      %p105 = scmp.eq.s32.totalorder %s22, 3
      %p106 = por %p104, %p105
      %p107 = scmp.ne.s32.totalorder %s96, %s97
      %p108 = scmp.eq.s32.totalorder %s22, 0
      %p109 = por %p107, %p108
      %p110 = scmp.ne.s32.totalorder %s96, %s97
      %p111 = scmp.eq.s32.totalorder %s23, 3
      %p112 = por %p110, %p111
      %p114 = scmp.ne.s32.totalorder %s97, %s113
      %p115 = scmp.eq.s32.totalorder %s23, 0
      %p116 = por %p114, %p115
      %s117 = ssub.s32 %s24, %s36
      %p118 = scmp.eq.s32.totalorder %s117, 0
      %s120 = sadd.s32 %s119, 1
      %s121 = scalar_select %p118, %s119, %s120
      %p124 = pneg %p118
      %p125 = scmp.eq.s32.totalorder %s17, 3
      %p126 = por %p124, %p125
      %p127 = scmp.ne.s32.totalorder %s119, %s122
      %p128 = scmp.eq.s32.totalorder %s17, 0
      %p129 = por %p127, %p128
      %p130 = scmp.ne.s32.totalorder %s119, %s122
      %p131 = scmp.eq.s32.totalorder %s22, 3
      %p132 = por %p130, %p131
      %p133 = scmp.ne.s32.totalorder %s122, %s123
      %p134 = scmp.eq.s32.totalorder %s22, 0
      %p135 = por %p133, %p134
      %p136 = scmp.ne.s32.totalorder %s122, %s123
      %p137 = scmp.eq.s32.totalorder %s23, 3
      %p138 = por %p136, %p137
      %p140 = scmp.ne.s32.totalorder %s123, %s139
      %p141 = scmp.eq.s32.totalorder %s23, 0
      %p142 = por %p140, %p141
      %s143 = ssub.s32 %s24, %s36
      %p144 = scmp.eq.s32.totalorder %s143, 0
      %s146 = sadd.s32 %s145, 1
      %s147 = scalar_select %p144, %s145, %s146
      %p150 = pneg %p144
      %p151 = scmp.eq.s32.totalorder %s17, 3
      %p152 = por %p150, %p151
      %p153 = scmp.ne.s32.totalorder %s145, %s148
      %p154 = scmp.eq.s32.totalorder %s17, 0
      %p155 = por %p153, %p154
      %p156 = scmp.ne.s32.totalorder %s145, %s148
      %p157 = scmp.eq.s32.totalorder %s22, 3
      %p158 = por %p156, %p157
      %p159 = scmp.ne.s32.totalorder %s148, %s149
      %p160 = scmp.eq.s32.totalorder %s22, 0
      %p161 = por %p159, %p160
      %p162 = scmp.ne.s32.totalorder %s148, %s149
      %p163 = scmp.eq.s32.totalorder %s23, 3
      %p164 = por %p162, %p163
      %p166 = scmp.ne.s32.totalorder %s149, %s165
      %p167 = scmp.eq.s32.totalorder %s23, 0
      %p168 = por %p166, %p167
      %p169 = scmp.le.s32.totalorder 1, %s17
      %p170 = scmp.lt.s32.totalorder %s17, 5
      %p171 = pnand %p169, %p170
      %p172 = pneg %p171
      // Predicated region
      $region9: #{_hyperconv_propagate.3} parent=5 // pred_check
        _
      $region10: #{_hyperconv_propagate.3} parent=5 // pred_check_branch
        %174 = sbr.rel (%p171) target = $region12
      $region11: #{_hyperconv_propagate.3} parent=5 // pred_region
        %s175 = ssub.s32 %s17, 1
      $region12: #{_hyperconv_propagate.3} parent=5 // pred_fallthru
        _
      %p176 = scmp.lt.s32.totalorder %s17, 4
      // Predicated region
      $region13: #{_hyperconv_propagate.3} parent=5 // pred_check
        %p177 = pneg %p176
      $region14: #{_hyperconv_propagate.3} parent=5 // pred_check_branch
        %179 = sbr.rel (%p177) target = $region16
      $region15: #{_hyperconv_propagate.3} parent=5 // pred_region
        // Predicated region
        $region17: #{_hyperconv_propagate.3} parent=15 // pred_check
          %p180 = pneg %p51
        $region18: #{_hyperconv_propagate.3} parent=15 // pred_check_branch
          %182 = sbr.rel (%p180) target = $region20
        $region19: #{_hyperconv_propagate.3} parent=15 // pred_region
          %s183 = sand.u32 %s41, 1
          %s184 = scalar_lea.sflag [#allocation4], %s183
          %s185 = sand.u32 %s41, 1
          %s186 = smul.addr %s185, 128
          %s187 = scalar_lea.vmem [#allocation3], %s186
          %s188 = smul.u32 16, %s24
          %190 = vsyncadd %s184, 0
          %s191 = smul.addr %s188, 2
          %s192 = sadd.s32 %s25, %s191
          %s193 = smul.addr %s192, 8
          %s194 = scalar_lea.hbm %s0, %s193
          %s195 = sshll.u32 %s194, 4
          %s196 = int_to_ptr.hbm [resolvable:$true] %s195
          %s197 = sshll.u32 %s187, 4
          %s198 = int_to_ptr.vmem [resolvable:$true] %s197
          %203 = dma.hbm_to_vmem [thread:$0]  %s196, 2048, %s198, %s184, 256, 128, 8
        $region20: #{_hyperconv_propagate.3} parent=15 // pred_fallthru
          _
        // Predicated region
        $region21: #{_hyperconv_propagate.3} parent=15 // pred_check
          %p204 = pneg %p77
        $region22: #{_hyperconv_propagate.3} parent=15 // pred_check_branch
          %206 = sbr.rel (%p204) target = $region24
        $region23: #{_hyperconv_propagate.3} parent=15 // pred_region
          %s207 = sand.u32 %s17, 1
          %s208 = scalar_lea.sflag [#allocation6], %s207
          %s209 = sand.u32 %s67, 1
          %s210 = smul.addr %s209, 128
          %s211 = scalar_lea.vmem [#allocation5], %s210
          %s212 = smul.u32 16, %s25
          %214 = vsyncadd %s208, 0
          %s215 = smul.addr %s212, 8
          %s216 = scalar_lea.hbm %s1, %s215
          %s217 = sshll.u32 %s216, 4
          %s218 = int_to_ptr.hbm [resolvable:$true] %s217
          %s219 = sshll.u32 %s211, 4
          %s220 = int_to_ptr.vmem [resolvable:$true] %s219
          %225 = dma.hbm_to_vmem [thread:$0]  %s218, 2048, %s220, %s208, 128, 128, 8
        $region24: #{_hyperconv_propagate.3} parent=15 // pred_fallthru
          _
        // Predicated region
        $region25: #{_hyperconv_propagate.3} parent=15 // pred_check
          %p226 = pneg %p103
        $region26: #{_hyperconv_propagate.3} parent=15 // pred_check_branch
          %228 = sbr.rel (%p226) target = $region28
        $region27: #{_hyperconv_propagate.3} parent=15 // pred_region
          %s229 = sand.u32 %s17, 1
          %s230 = scalar_lea.sflag [#allocation6], %s229
          %s231 = sand.u32 %s93, 1
          %s232 = smul.addr %s231, 128
          %s233 = scalar_lea.vmem [#allocation7], %s232
          %s234 = smul.u32 16, %s24
          %236 = vsyncadd %s230, 0
          %s237 = smul.addr %s234, 8
          %s238 = scalar_lea.hbm %s2, %s237
          %s239 = sshll.u32 %s238, 4
          %s240 = int_to_ptr.hbm [resolvable:$true] %s239
          %s241 = sshll.u32 %s233, 4
          %s242 = int_to_ptr.vmem [resolvable:$true] %s241
          %247 = dma.hbm_to_vmem [thread:$0]  %s240, 2048, %s242, %s230, 128, 128, 8
        $region28: #{_hyperconv_propagate.3} parent=15 // pred_fallthru
          _
      $region16: #{_hyperconv_propagate.3} parent=5 // pred_fallthru
        _
      %p248 = scmp.le.s32.totalorder 1, %s17
      %p249 = scmp.lt.s32.totalorder %s17, 5
      %p250 = pnand %p248, %p249
      %p251 = pneg %p250
      // Predicated region
      $region29: #{_hyperconv_propagate.3} parent=5 // pred_check
        _
      $region30: #{_hyperconv_propagate.3} parent=5 // pred_check_branch
        %253 = sbr.rel (%p250) target = $region32
      $region31: #{_hyperconv_propagate.3} parent=5 // pred_region
        %s254 = ssub.s32 %s17, 1
        %s255 = sand.u32 %s44, 1
        %s256 = scalar_lea.sflag [#allocation4], %s255
        %s257 = sand.u32 %s44, 1
        %s258 = smul.addr %s257, 128
        %s259 = scalar_lea.vmem [#allocation3], %s258
        // Predicated region
        $region33: #{_hyperconv_propagate.3} parent=31 // pred_check
          %p260 = pneg %p57
        $region34: #{_hyperconv_propagate.3} parent=31 // pred_check_branch
          %262 = sbr.rel (%p260) target = $region36
        $region35: #{_hyperconv_propagate.3} parent=31 // pred_region
          %264 = dma.done %s256, 2048
        $region36: #{_hyperconv_propagate.3} parent=31 // pred_fallthru
          _
        %s265 = sand.u32 %s22, 1
        %s266 = scalar_lea.sflag [#allocation6], %s265
        %s267 = sand.u32 %s70, 1
        %s268 = smul.addr %s267, 128
        %s269 = scalar_lea.vmem [#allocation5], %s268
        // Predicated region
        $region37: #{_hyperconv_propagate.3} parent=31 // pred_check
          %p270 = pneg %p83
        $region38: #{_hyperconv_propagate.3} parent=31 // pred_check_branch
          %272 = sbr.rel (%p270) target = $region40
        $region39: #{_hyperconv_propagate.3} parent=31 // pred_region
          %274 = dma.done %s266, 2048
        $region40: #{_hyperconv_propagate.3} parent=31 // pred_fallthru
          _
        %s275 = sand.u32 %s22, 1
        %s276 = scalar_lea.sflag [#allocation6], %s275
        %s277 = sand.u32 %s96, 1
        %s278 = smul.addr %s277, 128
        %s279 = scalar_lea.vmem [#allocation7], %s278
        // Predicated region
        $region41: #{_hyperconv_propagate.3} parent=31 // pred_check
          %p280 = pneg %p109
        $region42: #{_hyperconv_propagate.3} parent=31 // pred_check_branch
          %282 = sbr.rel (%p280) target = $region44
        $region43: #{_hyperconv_propagate.3} parent=31 // pred_region
          %284 = dma.done %s276, 2048
        $region44: #{_hyperconv_propagate.3} parent=31 // pred_fallthru
          _
        %s285 = sand.u32 %s44, 1
        %s286 = scalar_lea.sflag [#allocation4], %s285
        %s287 = sand.u32 %s44, 1
        %s288 = smul.addr %s287, 128
        %s289 = scalar_lea.vmem [#allocation3], %s288
        %p290 = pneg %p57
        %p291 = pneg %p54
        %s292 = sand.u32 %s22, 1
        %s293 = scalar_lea.sflag [#allocation6], %s292
        %s294 = sand.u32 %s70, 1
        %s295 = smul.addr %s294, 128
        %s296 = scalar_lea.vmem [#allocation5], %s295
        %p297 = pneg %p83
        %p298 = pneg %p80
        %s299 = sand.u32 %s22, 1
        %s300 = scalar_lea.sflag [#allocation6], %s299
        %s301 = sand.u32 %s96, 1
        %s302 = smul.addr %s301, 128
        %s303 = scalar_lea.vmem [#allocation7], %s302
        %p304 = pneg %p109
        %p305 = pneg %p106
        %p306 = pneg %p135
        %p307 = pneg %p132
        %s308 = smul.u32 16, %s26
        %p309 = scmp.lt.s32.totalorder %s308, 31
        %s310 = scalar_select %p309, %s308, 31
        %s311 = smul.addr %s310, 8
        %s312 = scalar_lea.vmem %s3, %s311
        %p313 = pneg %p161
        %p314 = pneg %p158
        %s315 = smul.u32 16, %s26
        %p316 = scmp.lt.s32.totalorder %s315, 31
        %s317 = scalar_select %p316, %s315, 31
        %s318 = smul.addr %s317, 8
        %s319 = scalar_lea.vmem %s4, %s318
        %s320 = smul.u32 16, %s26
        %s321 = smul.u32 16, %s27
        %s322 = smul.u32 16, %s26
        %s323 = smul.u32 16, %s26
        %p324 = scmp.lt.s32.totalorder %s323, 31
        %s325 = scalar_select %p324, %s323, 31
        %s326 = smul.addr %s325, 8
        %s327 = scalar_lea.vmem %s3, %s326
        %s328 = smul.u32 16, %s26
        %s329 = smul.u32 16, %s26
        %p330 = scmp.lt.s32.totalorder %s329, 31
        %s331 = scalar_select %p330, %s329, 31
        %s332 = smul.addr %s331, 8
        %s333 = scalar_lea.vmem %s4, %s332
        %s334 = smul.u32 16, %s26
        %p335 = scmp.eq.s32.totalorder %s27, 0
        // Predicated region
        $region45: #{_hyperconv_propagate.3} parent=31 // pred_check
          %p336 = pneg %p335
        $region46: #{_hyperconv_propagate.3} parent=31 // pred_check_branch
          %338 = sbr.rel (%p336) target = $region48
        $region47: #{_hyperconv_propagate.3} parent=31 // pred_region
          %339 = vst [vmem:[#allocation2] sm:$0xff] 0.0
          %340 = vst [vmem:[#allocation2 + $0x8] sm:$0xff] 0.0
          %341 = vst [vmem:[#allocation2 + $0x10] sm:$0xff] 0.0
          %342 = vst [vmem:[#allocation2 + $0x18] sm:$0xff] 0.0
          %343 = vst [vmem:[#allocation2 + $0x20] sm:$0xff] 0.0
          %344 = vst [vmem:[#allocation2 + $0x28] sm:$0xff] 0.0
          %345 = vst [vmem:[#allocation2 + $0x30] sm:$0xff] 0.0
          %346 = vst [vmem:[#allocation2 + $0x38] sm:$0xff] 0.0
          %347 = vst [vmem:[#allocation2 + $0x40] sm:$0xff] 0.0
          %348 = vst [vmem:[#allocation2 + $0x48] sm:$0xff] 0.0
          %349 = vst [vmem:[#allocation2 + $0x50] sm:$0xff] 0.0
          %350 = vst [vmem:[#allocation2 + $0x58] sm:$0xff] 0.0
          %351 = vst [vmem:[#allocation2 + $0x60] sm:$0xff] 0.0
          %352 = vst [vmem:[#allocation2 + $0x68] sm:$0xff] 0.0
          %353 = vst [vmem:[#allocation2 + $0x70] sm:$0xff] 0.0
          %354 = vst [vmem:[#allocation2 + $0x78] sm:$0xff] 0.0
        $region48: #{_hyperconv_propagate.3} parent=31 // pred_fallthru
          _
        %v355 = vld [vmem:[#allocation2] sm:$0xff]
        %v356 = vld [vmem:[#allocation2 + $0x8] sm:$0xff]
        %v357 = vld [vmem:[#allocation2 + $0x10] sm:$0xff]
        %v358 = vld [vmem:[#allocation2 + $0x18] sm:$0xff]
        %v359 = vld [vmem:[#allocation2 + $0x20] sm:$0xff]
        %v360 = vld [vmem:[#allocation2 + $0x28] sm:$0xff]
        %v361 = vld [vmem:[#allocation2 + $0x30] sm:$0xff]
        %v362 = vld [vmem:[#allocation2 + $0x38] sm:$0xff]
        %v363 = vld [vmem:[#allocation2 + $0x40] sm:$0xff]
        %v364 = vld [vmem:[#allocation2 + $0x48] sm:$0xff]
        %v365 = vld [vmem:[#allocation2 + $0x50] sm:$0xff]
        %v366 = vld [vmem:[#allocation2 + $0x58] sm:$0xff]
        %v367 = vld [vmem:[#allocation2 + $0x60] sm:$0xff]
        %v368 = vld [vmem:[#allocation2 + $0x68] sm:$0xff]
        %v369 = vld [vmem:[#allocation2 + $0x70] sm:$0xff]
        %v370 = vld [vmem:[#allocation2 + $0x78] sm:$0xff]
        %v371 = vld [vmem:[%s259] sm:$0xff]
        %v372 = vld [vmem:[%s259 + $0x8] sm:$0xff]
        %v373 = vld [vmem:[%s259 + $0x10] sm:$0xff]
        %v374 = vld [vmem:[%s259 + $0x18] sm:$0xff]
        %v375 = vld [vmem:[%s259 + $0x20] sm:$0xff]
        %v376 = vld [vmem:[%s259 + $0x28] sm:$0xff]
        %v377 = vld [vmem:[%s259 + $0x30] sm:$0xff]
        %v378 = vld [vmem:[%s259 + $0x38] sm:$0xff]
        %v379 = vld [vmem:[%s259 + $0x40] sm:$0xff]
        %v380 = vld [vmem:[%s259 + $0x48] sm:$0xff]
        %v381 = vld [vmem:[%s259 + $0x50] sm:$0xff]
        %v382 = vld [vmem:[%s259 + $0x58] sm:$0xff]
        %v383 = vld [vmem:[%s259 + $0x60] sm:$0xff]
        %v384 = vld [vmem:[%s259 + $0x68] sm:$0xff]
        %v385 = vld [vmem:[%s259 + $0x70] sm:$0xff]
        %v386 = vld [vmem:[%s259 + $0x78] sm:$0xff]
        %v387 = vld [vmem:[%s269] sm:$0xff]
        %v388 = vld [vmem:[%s269 + $0x8] sm:$0xff]
        %v389 = vld [vmem:[%s269 + $0x10] sm:$0xff]
        %v390 = vld [vmem:[%s269 + $0x18] sm:$0xff]
        %v391 = vld [vmem:[%s269 + $0x20] sm:$0xff]
        %v392 = vld [vmem:[%s269 + $0x28] sm:$0xff]
        %v393 = vld [vmem:[%s269 + $0x30] sm:$0xff]
        %v394 = vld [vmem:[%s269 + $0x38] sm:$0xff]
        %v395 = vld [vmem:[%s269 + $0x40] sm:$0xff]
        %v396 = vld [vmem:[%s269 + $0x48] sm:$0xff]
        %v397 = vld [vmem:[%s269 + $0x50] sm:$0xff]
        %v398 = vld [vmem:[%s269 + $0x58] sm:$0xff]
        %v399 = vld [vmem:[%s269 + $0x60] sm:$0xff]
        %v400 = vld [vmem:[%s269 + $0x68] sm:$0xff]
        %v401 = vld [vmem:[%s269 + $0x70] sm:$0xff]
        %v402 = vld [vmem:[%s269 + $0x78] sm:$0xff]
        %403 = vmatpush.msra.mxu0 %v402
        %404 = vmatpush.msra.mxu0 %v401
        %405 = vmatpush.msra.mxu0 %v400
        %406 = vmatpush.msra.mxu0 %v399
        %407 = vmatpush.msra.mxu0 %v398
        %408 = vmatpush.msra.mxu0 %v397
        %409 = vmatpush.msra.mxu0 %v396
        %410 = vmatpush.msra.mxu0 %v395
        %411 = vmatpush.msra.mxu0 %v394
        %412 = vmatpush.msra.mxu0 %v393
        %413 = vmatpush.msra.mxu0 %v392
        %414 = vmatpush.msra.mxu0 %v391
        %415 = vmatpush.msra.mxu0 %v390
        %416 = vmatpush.msra.mxu0 %v389
        %417 = vmatpush.msra.mxu0 %v388
        %418 = vmatpush.msra.mxu0 %v387
        %419 = vmatmul.f32.gmra.mxu0 %v371
        %v420 = vpop.f32.mrf.mxu0
        %v421 = vadd.f32 0.0, %v420
        %422 = vmatmul.f32.gmra.mxu0 %v372
        %v423 = vpop.f32.mrf.mxu0
        %v424 = vadd.f32 0.0, %v423
        %425 = vmatmul.f32.gmra.mxu0 %v373
        %v426 = vpop.f32.mrf.mxu0
        %v427 = vadd.f32 0.0, %v426
        %428 = vmatmul.f32.gmra.mxu0 %v374
        %v429 = vpop.f32.mrf.mxu0
        %v430 = vadd.f32 0.0, %v429
        %431 = vmatmul.f32.gmra.mxu0 %v375
        %v432 = vpop.f32.mrf.mxu0
        %v433 = vadd.f32 0.0, %v432
        %434 = vmatmul.f32.gmra.mxu0 %v376
        %v435 = vpop.f32.mrf.mxu0
        %v436 = vadd.f32 0.0, %v435
        %437 = vmatmul.f32.gmra.mxu0 %v377
        %v438 = vpop.f32.mrf.mxu0
        %v439 = vadd.f32 0.0, %v438
        %440 = vmatmul.f32.gmra.mxu0 %v378
        %v441 = vpop.f32.mrf.mxu0
        %v442 = vadd.f32 0.0, %v441
        %443 = vmatmul.f32.gmra.mxu0 %v379
        %v444 = vpop.f32.mrf.mxu0
        %v445 = vadd.f32 0.0, %v444
        %446 = vmatmul.f32.gmra.mxu0 %v380
        %v447 = vpop.f32.mrf.mxu0
        %v448 = vadd.f32 0.0, %v447
        %449 = vmatmul.f32.gmra.mxu0 %v381
        %v450 = vpop.f32.mrf.mxu0
        %v451 = vadd.f32 0.0, %v450
        %452 = vmatmul.f32.gmra.mxu0 %v382
        %v453 = vpop.f32.mrf.mxu0
        %v454 = vadd.f32 0.0, %v453
        %455 = vmatmul.f32.gmra.mxu0 %v383
        %v456 = vpop.f32.mrf.mxu0
        %v457 = vadd.f32 0.0, %v456
        %458 = vmatmul.f32.gmra.mxu0 %v384
        %v459 = vpop.f32.mrf.mxu0
        %v460 = vadd.f32 0.0, %v459
        %461 = vmatmul.f32.gmra.mxu0 %v385
        %v462 = vpop.f32.mrf.mxu0
        %v463 = vadd.f32 0.0, %v462
        %464 = vmatmul.f32.gmra.mxu0 %v386
        %v465 = vpop.f32.mrf.mxu0
        %v466 = vadd.f32 0.0, %v465
        %467 = vdwg.mxu0
        %v468 = vadd.f32 %v355, %v421
        %v469 = vadd.f32 %v356, %v424
        %v470 = vadd.f32 %v357, %v427
        %v471 = vadd.f32 %v358, %v430
        %v472 = vadd.f32 %v359, %v433
        %v473 = vadd.f32 %v360, %v436
        %v474 = vadd.f32 %v361, %v439
        %v475 = vadd.f32 %v362, %v442
        %v476 = vadd.f32 %v363, %v445
        %v477 = vadd.f32 %v364, %v448
        %v478 = vadd.f32 %v365, %v451
        %v479 = vadd.f32 %v366, %v454
        %v480 = vadd.f32 %v367, %v457
        %v481 = vadd.f32 %v368, %v460
        %v482 = vadd.f32 %v369, %v463
        %v483 = vadd.f32 %v370, %v466
        %484 = vst [vmem:[#allocation2] sm:$0xff] %v468
        %485 = vst [vmem:[#allocation2 + $0x8] sm:$0xff] %v469
        %486 = vst [vmem:[#allocation2 + $0x10] sm:$0xff] %v470
        %487 = vst [vmem:[#allocation2 + $0x18] sm:$0xff] %v471
        %488 = vst [vmem:[#allocation2 + $0x20] sm:$0xff] %v472
        %489 = vst [vmem:[#allocation2 + $0x28] sm:$0xff] %v473
        %490 = vst [vmem:[#allocation2 + $0x30] sm:$0xff] %v474
        %491 = vst [vmem:[#allocation2 + $0x38] sm:$0xff] %v475
        %492 = vst [vmem:[#allocation2 + $0x40] sm:$0xff] %v476
        %493 = vst [vmem:[#allocation2 + $0x48] sm:$0xff] %v477
        %494 = vst [vmem:[#allocation2 + $0x50] sm:$0xff] %v478
        %495 = vst [vmem:[#allocation2 + $0x58] sm:$0xff] %v479
        %496 = vst [vmem:[#allocation2 + $0x60] sm:$0xff] %v480
        %497 = vst [vmem:[#allocation2 + $0x68] sm:$0xff] %v481
        %498 = vst [vmem:[#allocation2 + $0x70] sm:$0xff] %v482
        %499 = vst [vmem:[#allocation2 + $0x78] sm:$0xff] %v483
        %p500 = scmp.eq.s32.totalorder %s27, 1
        // Predicated region
        $region49: #{_hyperconv_propagate.3} parent=31 // pred_check
          %p501 = pneg %p500
        $region50: #{_hyperconv_propagate.3} parent=31 // pred_check_branch
          %503 = sbr.rel (%p501) target = $region52
        $region51: #{_hyperconv_propagate.3} parent=31 // pred_region
          %v504 = vld [vmem:[#allocation2] sm:$0xff]
          %v505 = vld [vmem:[#allocation2 + $0x8] sm:$0xff]
          %v506 = vld [vmem:[#allocation2 + $0x10] sm:$0xff]
          %v507 = vld [vmem:[#allocation2 + $0x18] sm:$0xff]
          %v508 = vld [vmem:[#allocation2 + $0x20] sm:$0xff]
          %v509 = vld [vmem:[#allocation2 + $0x28] sm:$0xff]
          %v510 = vld [vmem:[#allocation2 + $0x30] sm:$0xff]
          %v511 = vld [vmem:[#allocation2 + $0x38] sm:$0xff]
          %v512 = vld [vmem:[#allocation2 + $0x40] sm:$0xff]
          %v513 = vld [vmem:[#allocation2 + $0x48] sm:$0xff]
          %v514 = vld [vmem:[#allocation2 + $0x50] sm:$0xff]
          %v515 = vld [vmem:[#allocation2 + $0x58] sm:$0xff]
          %v516 = vld [vmem:[#allocation2 + $0x60] sm:$0xff]
          %v517 = vld [vmem:[#allocation2 + $0x68] sm:$0xff]
          %v518 = vld [vmem:[#allocation2 + $0x70] sm:$0xff]
          %v519 = vld [vmem:[#allocation2 + $0x78] sm:$0xff]
          %520 = vst [vmem:[%s327] sm:$0xff] %v504
          %521 = vst [vmem:[%s327 + $0x8] sm:$0xff] %v505
          %522 = vst [vmem:[%s327 + $0x10] sm:$0xff] %v506
          %523 = vst [vmem:[%s327 + $0x18] sm:$0xff] %v507
          %524 = vst [vmem:[%s327 + $0x20] sm:$0xff] %v508
          %525 = vst [vmem:[%s327 + $0x28] sm:$0xff] %v509
          %526 = vst [vmem:[%s327 + $0x30] sm:$0xff] %v510
          %527 = vst [vmem:[%s327 + $0x38] sm:$0xff] %v511
          %528 = vst [vmem:[%s327 + $0x40] sm:$0xff] %v512
          %529 = vst [vmem:[%s327 + $0x48] sm:$0xff] %v513
          %530 = vst [vmem:[%s327 + $0x50] sm:$0xff] %v514
          %531 = vst [vmem:[%s327 + $0x58] sm:$0xff] %v515
          %532 = vst [vmem:[%s327 + $0x60] sm:$0xff] %v516
          %533 = vst [vmem:[%s327 + $0x68] sm:$0xff] %v517
          %534 = vst [vmem:[%s327 + $0x70] sm:$0xff] %v518
          %535 = vst [vmem:[%s327 + $0x78] sm:$0xff] %v519
          %v536 = vld [vmem:[%s279] sm:$0xff]
          %v537 = vld [vmem:[%s279 + $0x8] sm:$0xff]
          %v538 = vld [vmem:[%s279 + $0x10] sm:$0xff]
          %v539 = vld [vmem:[%s279 + $0x18] sm:$0xff]
          %v540 = vld [vmem:[%s279 + $0x20] sm:$0xff]
          %v541 = vld [vmem:[%s279 + $0x28] sm:$0xff]
          %v542 = vld [vmem:[%s279 + $0x30] sm:$0xff]
          %v543 = vld [vmem:[%s279 + $0x38] sm:$0xff]
          %v544 = vld [vmem:[%s279 + $0x40] sm:$0xff]
          %v545 = vld [vmem:[%s279 + $0x48] sm:$0xff]
          %v546 = vld [vmem:[%s279 + $0x50] sm:$0xff]
          %v547 = vld [vmem:[%s279 + $0x58] sm:$0xff]
          %v548 = vld [vmem:[%s279 + $0x60] sm:$0xff]
          %v549 = vld [vmem:[%s279 + $0x68] sm:$0xff]
          %v550 = vld [vmem:[%s279 + $0x70] sm:$0xff]
          %v551 = vld [vmem:[%s279 + $0x78] sm:$0xff]
          %v552 = vadd.f32 %v536, %v504
          %v553 = vadd.f32 %v537, %v505
          %v554 = vadd.f32 %v538, %v506
          %v555 = vadd.f32 %v539, %v507
          %v556 = vadd.f32 %v540, %v508
          %v557 = vadd.f32 %v541, %v509
          %v558 = vadd.f32 %v542, %v510
          %v559 = vadd.f32 %v543, %v511
          %v560 = vadd.f32 %v544, %v512
          %v561 = vadd.f32 %v545, %v513
          %v562 = vadd.f32 %v546, %v514
          %v563 = vadd.f32 %v547, %v515
          %v564 = vadd.f32 %v548, %v516
          %v565 = vadd.f32 %v549, %v517
          %v566 = vadd.f32 %v550, %v518
          %v567 = vadd.f32 %v551, %v519
          %568 = vst [vmem:[%s333] sm:$0xff] %v552
          %569 = vst [vmem:[%s333 + $0x8] sm:$0xff] %v553
          %570 = vst [vmem:[%s333 + $0x10] sm:$0xff] %v554
          %571 = vst [vmem:[%s333 + $0x18] sm:$0xff] %v555
          %572 = vst [vmem:[%s333 + $0x20] sm:$0xff] %v556
          %573 = vst [vmem:[%s333 + $0x28] sm:$0xff] %v557
          %574 = vst [vmem:[%s333 + $0x30] sm:$0xff] %v558
          %575 = vst [vmem:[%s333 + $0x38] sm:$0xff] %v559
          %576 = vst [vmem:[%s333 + $0x40] sm:$0xff] %v560
          %577 = vst [vmem:[%s333 + $0x48] sm:$0xff] %v561
          %578 = vst [vmem:[%s333 + $0x50] sm:$0xff] %v562
          %579 = vst [vmem:[%s333 + $0x58] sm:$0xff] %v563
          %580 = vst [vmem:[%s333 + $0x60] sm:$0xff] %v564
          %581 = vst [vmem:[%s333 + $0x68] sm:$0xff] %v565
          %582 = vst [vmem:[%s333 + $0x70] sm:$0xff] %v566
          %583 = vst [vmem:[%s333 + $0x78] sm:$0xff] %v567
        $region52: #{_hyperconv_propagate.3} parent=31 // pred_fallthru
          _
        %s584 = smul.u32 16, %s26
        %p585 = scmp.lt.s32.totalorder %s584, 31
        %s586 = scalar_select %p585, %s584, 31
        %s587 = smul.addr %s586, 8
        %s588 = scalar_lea.vmem %s3, %s587
        %s589 = smul.u32 16, %s26
        %p590 = scmp.lt.s32.totalorder %s589, 31
        %s591 = scalar_select %p590, %s589, 31
        %s592 = smul.addr %s591, 8
        %s593 = scalar_lea.vmem %s4, %s592
        // Predicated region
        $region53: #{_hyperconv_propagate.3} parent=31 // pred_check
          %p594 = pneg %p132
        $region54: #{_hyperconv_propagate.3} parent=31 // pred_check_branch
          %596 = sbr.rel (%p594) target = $region56
        $region55: #{_hyperconv_propagate.3} parent=31 // pred_region
          %s597 = smul.u32 16, %s26
        $region56: #{_hyperconv_propagate.3} parent=31 // pred_fallthru
          _
        // Predicated region
        $region57: #{_hyperconv_propagate.3} parent=31 // pred_check
          %p598 = pneg %p158
        $region58: #{_hyperconv_propagate.3} parent=31 // pred_check_branch
          %600 = sbr.rel (%p598) target = $region60
        $region59: #{_hyperconv_propagate.3} parent=31 // pred_region
          %s601 = smul.u32 16, %s26
        $region60: #{_hyperconv_propagate.3} parent=31 // pred_fallthru
          _
      $region32: #{_hyperconv_propagate.3} parent=5 // pred_fallthru
        _
      %p602 = scmp.le.s32.totalorder 2, %s17
      // Predicated region
      $region61: #{_hyperconv_propagate.3} parent=5 // pred_check
        %p603 = pneg %p602
      $region62: #{_hyperconv_propagate.3} parent=5 // pred_check_branch
        %605 = sbr.rel (%p603) target = $region64
      $region63: #{_hyperconv_propagate.3} parent=5 // pred_region
        %s606 = ssub.s32 %s17, 2
        // Predicated region
        $region65: #{_hyperconv_propagate.3} parent=63 // pred_check
          %p607 = pneg %p138
        $region66: #{_hyperconv_propagate.3} parent=63 // pred_check_branch
          %609 = sbr.rel (%p607) target = $region68
        $region67: #{_hyperconv_propagate.3} parent=63 // pred_region
          %s610 = smul.u32 16, %s28
          %p611 = scmp.lt.s32.totalorder %s610, 31
          %s612 = scalar_select %p611, %s610, 31
          %s613 = smul.addr %s612, 8
          %s614 = scalar_lea.vmem %s3, %s613
        $region68: #{_hyperconv_propagate.3} parent=63 // pred_fallthru
          _
        // Predicated region
        $region69: #{_hyperconv_propagate.3} parent=63 // pred_check
          %p615 = pneg %p164
        $region70: #{_hyperconv_propagate.3} parent=63 // pred_check_branch
          %617 = sbr.rel (%p615) target = $region72
        $region71: #{_hyperconv_propagate.3} parent=63 // pred_region
          %s618 = smul.u32 16, %s28
          %p619 = scmp.lt.s32.totalorder %s618, 31
          %s620 = scalar_select %p619, %s618, 31
          %s621 = smul.addr %s620, 8
          %s622 = scalar_lea.vmem %s4, %s621
        $region72: #{_hyperconv_propagate.3} parent=63 // pred_fallthru
          _
      $region64: #{_hyperconv_propagate.3} parent=5 // pred_fallthru
        _
    $region6: #{_hyperconv_propagate.3} parent=1 // loop_footer
      %s21 = sadd.s32 1, %s17
    $region7: #{_hyperconv_propagate.3} parent=1 // loop_footer_branch
      %16 = sbr.rel target = $region3
    $region8: #{_hyperconv_propagate.3} parent=1 // loop_exit
      _
    %623 = vsyncpa [#allocation4], 1
    %s624 = scalar_lea.sflag [#allocation4], 1
    %625 = vsyncpa %s624, 1
    %626 = vsyncpa [#allocation6], 1
    %s627 = scalar_lea.sflag [#allocation6], 1
    %628 = vsyncpa %s627, 1

// kernel: _hyperconv_propagate.4
$region0: #{_hyperconv_propagate.4}
  #allocation0 [shape = 'u32[]', space=smem, size = 0x4, offset = 0x4, fixed_abs, tag = 'smem constant byte address 0x4 - core index']
  #allocation1 [shape = 'u32[72,128]{1,0:T(1,128)}', space=vmem, size = 0x9000, scoped, tag = 'internal scratch']
  #allocation2 [shape = 'f32[128,128]{1,0:T(8,128)}', space=vmem, size = 0x10000, scoped, tag = 'scratch operand']
  %s0 = inlined_call_operand.hbm [shape: f32[256,256], index: 0, kind: input, shape index: {}]
  %s1 = inlined_call_operand.vmem [shape: f32[256,128], index: 1, kind: input, shape index: {}]
  %s2 = inlined_call_operand.vmem [shape: f32[256,128], index: 2, kind: input, shape index: {}]
  %s3 = inlined_call_operand.vmem [shape: f32[256,128], index: 3, kind: output, shape index: {0}]
  %s4 = inlined_call_operand.vmem [shape: f32[256,128], index: 4, kind: output, shape index: {1}]
  %5 = xla_tuple %s3, %s4
  %s6 = sld [smem:[#allocation0]]
  $region65: #{_hyperconv_propagate.4} parent=0
    _
  %s8 = ssub.s32 1, %s6
  %s9 = scalar_select 0, %s8, %s6
  $region1: #{_hyperconv_propagate.4} parent=0
    #allocation3 [shape = 'u8[131072]{0}', space=vmem, size = 0x20000, scoped, tag = 'input window, operand 0']
    #allocation4 [shape = 's32[2]{0}', space=sflag, size = 0x8, scoped, tag = 'scoped memory for _hyperconv_propagate.4']
    %10 = vsyncpa [#allocation4], 0
    %s11 = scalar_lea.sflag [#allocation4], 1
    %12 = vsyncpa %s11, 0
    loop: start=0, step=1, limit=6
    $region2: #{_hyperconv_propagate.4} parent=1 // loop_pre_header
      _
    $region3: #{_hyperconv_propagate.4} parent=1 // loop_header
      %s14 = sphi 0, %s18
      %p15 = scmp.ge.s32.totalorder %s14, 6
      %s21 = sphi 0, %s33
      %s22 = sphi 0, %s29
      %s23 = sphi 0, %s21
      %s24 = sphi 0, %s22
      %s25 = sphi 0, %s23
      %s26 = sphi 0, %s24
      %s38 = sphi 0, %s40
      %s41 = sphi 0, %s38
      %s42 = sphi 0, %s41
      %s58 = sphi 0, %s42
      %s64 = sphi 0, %s66
      %s67 = sphi 0, %s64
      %s68 = sphi 0, %s67
      %s84 = sphi 0, %s68
      %s90 = sphi 0, %s92
      %s93 = sphi 0, %s90
      %s94 = sphi 0, %s93
      %s110 = sphi 0, %s94
      %s116 = sphi 0, %s118
      %s119 = sphi 0, %s116
      %s120 = sphi 0, %s119
      %s136 = sphi 0, %s120
      %s142 = sphi 0, %s144
      %s145 = sphi 0, %s142
      %s146 = sphi 0, %s145
      %s162 = sphi 0, %s146
    $region4: #{_hyperconv_propagate.4} parent=1 // loop_header_branch
      %17 = sbr.rel (%p15) target = $region8
    $region5: #{_hyperconv_propagate.4} parent=1 // loop_body
      %s19 = ssub.s32 %s14, 1
      %s20 = ssub.s32 %s14, 2
      %s27 = sadd.s32 1, %s22
      %p28 = scmp.ge.s32.totalorder %s27, 2
      %s29 = scalar_select %p28, 0, %s27
      %s30 = sadd.s32 1, %s21
      %s31 = scalar_select %p28, %s30, %s21
      %p32 = scmp.ge.s32.totalorder %s31, 2
      %s33 = scalar_select %p32, 0, %s31
      %s34 = ssub.s32 %s21, %s33
      %s35 = ssub.s32 %s22, %s29
      %s36 = sor.u32 %s34, %s35
      %p37 = scmp.eq.s32.totalorder %s36, 0
      %s39 = sadd.s32 %s38, 1
      %s40 = scalar_select %p37, %s38, %s39
      %p43 = pneg %p37
      %p44 = scmp.eq.s32.totalorder %s14, 3
      %p45 = por %p43, %p44
      %p46 = scmp.ne.s32.totalorder %s38, %s41
      %p47 = scmp.eq.s32.totalorder %s14, 0
      %p48 = por %p46, %p47
      %p49 = scmp.ne.s32.totalorder %s38, %s41
      %p50 = scmp.eq.s32.totalorder %s19, 3
      %p51 = por %p49, %p50
      %p52 = scmp.ne.s32.totalorder %s41, %s42
      %p53 = scmp.eq.s32.totalorder %s19, 0
      %p54 = por %p52, %p53
      %p55 = scmp.ne.s32.totalorder %s41, %s42
      %p56 = scmp.eq.s32.totalorder %s20, 3
      %p57 = por %p55, %p56
      %p59 = scmp.ne.s32.totalorder %s42, %s58
      %p60 = scmp.eq.s32.totalorder %s20, 0
      %p61 = por %p59, %p60
      %s62 = ssub.s32 %s22, %s29
      %p63 = scmp.eq.s32.totalorder %s62, 0
      %s65 = sadd.s32 %s64, 1
      %s66 = scalar_select %p63, %s64, %s65
      %p69 = pneg %p63
      %p70 = scmp.eq.s32.totalorder %s14, 3
      %p71 = por %p69, %p70
      %p72 = scmp.ne.s32.totalorder %s64, %s67
      %p73 = scmp.eq.s32.totalorder %s14, 0
      %p74 = por %p72, %p73
      %p75 = scmp.ne.s32.totalorder %s64, %s67
      %p76 = scmp.eq.s32.totalorder %s19, 3
      %p77 = por %p75, %p76
      %p78 = scmp.ne.s32.totalorder %s67, %s68
      %p79 = scmp.eq.s32.totalorder %s19, 0
      %p80 = por %p78, %p79
      %p81 = scmp.ne.s32.totalorder %s67, %s68
      %p82 = scmp.eq.s32.totalorder %s20, 3
      %p83 = por %p81, %p82
      %p85 = scmp.ne.s32.totalorder %s68, %s84
      %p86 = scmp.eq.s32.totalorder %s20, 0
      %p87 = por %p85, %p86
      %s88 = ssub.s32 %s21, %s33
      %p89 = scmp.eq.s32.totalorder %s88, 0
      %s91 = sadd.s32 %s90, 1
      %s92 = scalar_select %p89, %s90, %s91
      %p95 = pneg %p89
      %p96 = scmp.eq.s32.totalorder %s14, 3
      %p97 = por %p95, %p96
      %p98 = scmp.ne.s32.totalorder %s90, %s93
      %p99 = scmp.eq.s32.totalorder %s14, 0
      %p100 = por %p98, %p99
      %p101 = scmp.ne.s32.totalorder %s90, %s93
      %p102 = scmp.eq.s32.totalorder %s19, 3
      %p103 = por %p101, %p102
      %p104 = scmp.ne.s32.totalorder %s93, %s94
      %p105 = scmp.eq.s32.totalorder %s19, 0
      %p106 = por %p104, %p105
      %p107 = scmp.ne.s32.totalorder %s93, %s94
      %p108 = scmp.eq.s32.totalorder %s20, 3
      %p109 = por %p107, %p108
      %p111 = scmp.ne.s32.totalorder %s94, %s110
      %p112 = scmp.eq.s32.totalorder %s20, 0
      %p113 = por %p111, %p112
      %s114 = ssub.s32 %s21, %s33
      %p115 = scmp.eq.s32.totalorder %s114, 0
      %s117 = sadd.s32 %s116, 1
      %s118 = scalar_select %p115, %s116, %s117
      %p121 = pneg %p115
      %p122 = scmp.eq.s32.totalorder %s14, 3
      %p123 = por %p121, %p122
      %p124 = scmp.ne.s32.totalorder %s116, %s119
      %p125 = scmp.eq.s32.totalorder %s14, 0
      %p126 = por %p124, %p125
      %p127 = scmp.ne.s32.totalorder %s116, %s119
      %p128 = scmp.eq.s32.totalorder %s19, 3
      %p129 = por %p127, %p128
      %p130 = scmp.ne.s32.totalorder %s119, %s120
      %p131 = scmp.eq.s32.totalorder %s19, 0
      %p132 = por %p130, %p131
      %p133 = scmp.ne.s32.totalorder %s119, %s120
      %p134 = scmp.eq.s32.totalorder %s20, 3
      %p135 = por %p133, %p134
      %p137 = scmp.ne.s32.totalorder %s120, %s136
      %p138 = scmp.eq.s32.totalorder %s20, 0
      %p139 = por %p137, %p138
      %s140 = ssub.s32 %s21, %s33
      %p141 = scmp.eq.s32.totalorder %s140, 0
      %s143 = sadd.s32 %s142, 1
      %s144 = scalar_select %p141, %s142, %s143
      %p147 = pneg %p141
      %p148 = scmp.eq.s32.totalorder %s14, 3
      %p149 = por %p147, %p148
      %p150 = scmp.ne.s32.totalorder %s142, %s145
      %p151 = scmp.eq.s32.totalorder %s14, 0
      %p152 = por %p150, %p151
      %p153 = scmp.ne.s32.totalorder %s142, %s145
      %p154 = scmp.eq.s32.totalorder %s19, 3
      %p155 = por %p153, %p154
      %p156 = scmp.ne.s32.totalorder %s145, %s146
      %p157 = scmp.eq.s32.totalorder %s19, 0
      %p158 = por %p156, %p157
      %p159 = scmp.ne.s32.totalorder %s145, %s146
      %p160 = scmp.eq.s32.totalorder %s20, 3
      %p161 = por %p159, %p160
      %p163 = scmp.ne.s32.totalorder %s146, %s162
      %p164 = scmp.eq.s32.totalorder %s20, 0
      %p165 = por %p163, %p164
      %p166 = scmp.le.s32.totalorder 1, %s14
      %p167 = scmp.lt.s32.totalorder %s14, 5
      %p168 = pnand %p166, %p167
      %p169 = pneg %p168
      // Predicated region
      $region9: #{_hyperconv_propagate.4} parent=5 // pred_check
        _
      $region10: #{_hyperconv_propagate.4} parent=5 // pred_check_branch
        %171 = sbr.rel (%p168) target = $region12
      $region11: #{_hyperconv_propagate.4} parent=5 // pred_region
        %s172 = ssub.s32 %s14, 1
      $region12: #{_hyperconv_propagate.4} parent=5 // pred_fallthru
        _
      %p173 = scmp.lt.s32.totalorder %s14, 4
      // Predicated region
      $region13: #{_hyperconv_propagate.4} parent=5 // pred_check
        %p174 = pneg %p173
      $region14: #{_hyperconv_propagate.4} parent=5 // pred_check_branch
        %176 = sbr.rel (%p174) target = $region16
      $region15: #{_hyperconv_propagate.4} parent=5 // pred_region
        // Predicated region
        $region17: #{_hyperconv_propagate.4} parent=15 // pred_check
          %p177 = pneg %p48
        $region18: #{_hyperconv_propagate.4} parent=15 // pred_check_branch
          %179 = sbr.rel (%p177) target = $region20
        $region19: #{_hyperconv_propagate.4} parent=15 // pred_region
          %s180 = sand.u32 %s38, 1
          %s181 = scalar_lea.sflag [#allocation4], %s180
          %s182 = sand.u32 %s38, 1
          %s183 = smul.addr %s182, 128
          %s184 = scalar_lea.vmem [#allocation3], %s183
          %s185 = smul.u32 16, %s21
          %187 = vsyncadd %s181, 0
          %s188 = smul.addr %s185, 2
          %s189 = sadd.s32 %s22, %s188
          %s190 = smul.addr %s189, 8
          %s191 = scalar_lea.hbm %s0, %s190
          %s192 = sshll.u32 %s191, 4
          %s193 = int_to_ptr.hbm [resolvable:$true] %s192
          %s194 = sshll.u32 %s184, 4
          %s195 = int_to_ptr.vmem [resolvable:$true] %s194
          %200 = dma.hbm_to_vmem [thread:$0]  %s193, 2048, %s195, %s181, 256, 128, 8
        $region20: #{_hyperconv_propagate.4} parent=15 // pred_fallthru
          _
        // Predicated region
        $region21: #{_hyperconv_propagate.4} parent=15 // pred_check
          %p201 = pneg %p74
        $region22: #{_hyperconv_propagate.4} parent=15 // pred_check_branch
          %203 = sbr.rel (%p201) target = $region24
        $region23: #{_hyperconv_propagate.4} parent=15 // pred_region
          %s204 = smul.u32 16, %s22
          %p205 = scmp.lt.s32.totalorder %s204, 31
          %s206 = scalar_select %p205, %s204, 31
          %s207 = smul.addr %s206, 8
          %s208 = scalar_lea.vmem %s1, %s207
          %s209 = smul.u32 16, %s22
        $region24: #{_hyperconv_propagate.4} parent=15 // pred_fallthru
          _
        // Predicated region
        $region25: #{_hyperconv_propagate.4} parent=15 // pred_check
          %p210 = pneg %p100
        $region26: #{_hyperconv_propagate.4} parent=15 // pred_check_branch
          %212 = sbr.rel (%p210) target = $region28
        $region27: #{_hyperconv_propagate.4} parent=15 // pred_region
          %s213 = smul.u32 16, %s21
          %p214 = scmp.lt.s32.totalorder %s213, 31
          %s215 = scalar_select %p214, %s213, 31
          %s216 = smul.addr %s215, 8
          %s217 = scalar_lea.vmem %s2, %s216
          %s218 = smul.u32 16, %s21
        $region28: #{_hyperconv_propagate.4} parent=15 // pred_fallthru
          _
      $region16: #{_hyperconv_propagate.4} parent=5 // pred_fallthru
        _
      %p219 = scmp.le.s32.totalorder 1, %s14
      %p220 = scmp.lt.s32.totalorder %s14, 5
      %p221 = pnand %p219, %p220
      %p222 = pneg %p221
      // Predicated region
      $region29: #{_hyperconv_propagate.4} parent=5 // pred_check
        _
      $region30: #{_hyperconv_propagate.4} parent=5 // pred_check_branch
        %224 = sbr.rel (%p221) target = $region32
      $region31: #{_hyperconv_propagate.4} parent=5 // pred_region
        %s225 = ssub.s32 %s14, 1
        %s226 = sand.u32 %s41, 1
        %s227 = scalar_lea.sflag [#allocation4], %s226
        %s228 = sand.u32 %s41, 1
        %s229 = smul.addr %s228, 128
        %s230 = scalar_lea.vmem [#allocation3], %s229
        // Predicated region
        $region33: #{_hyperconv_propagate.4} parent=31 // pred_check
          %p231 = pneg %p54
        $region34: #{_hyperconv_propagate.4} parent=31 // pred_check_branch
          %233 = sbr.rel (%p231) target = $region36
        $region35: #{_hyperconv_propagate.4} parent=31 // pred_region
          %235 = dma.done %s227, 2048
        $region36: #{_hyperconv_propagate.4} parent=31 // pred_fallthru
          _
        %s236 = sand.u32 %s41, 1
        %s237 = scalar_lea.sflag [#allocation4], %s236
        %s238 = sand.u32 %s41, 1
        %s239 = smul.addr %s238, 128
        %s240 = scalar_lea.vmem [#allocation3], %s239
        %p241 = pneg %p54
        %p242 = pneg %p51
        %s243 = smul.u32 16, %s24
        %p244 = scmp.lt.s32.totalorder %s243, 31
        %s245 = scalar_select %p244, %s243, 31
        %s246 = smul.addr %s245, 8
        %s247 = scalar_lea.vmem %s1, %s246
        %p248 = pneg %p80
        %p249 = pneg %p77
        %s250 = smul.u32 16, %s23
        %p251 = scmp.lt.s32.totalorder %s250, 31
        %s252 = scalar_select %p251, %s250, 31
        %s253 = smul.addr %s252, 8
        %s254 = scalar_lea.vmem %s2, %s253
        %p255 = pneg %p106
        %p256 = pneg %p103
        %p257 = pneg %p132
        %p258 = pneg %p129
        %s259 = smul.u32 16, %s23
        %p260 = scmp.lt.s32.totalorder %s259, 31
        %s261 = scalar_select %p260, %s259, 31
        %s262 = smul.addr %s261, 8
        %s263 = scalar_lea.vmem %s3, %s262
        %p264 = pneg %p158
        %p265 = pneg %p155
        %s266 = smul.u32 16, %s23
        %p267 = scmp.lt.s32.totalorder %s266, 31
        %s268 = scalar_select %p267, %s266, 31
        %s269 = smul.addr %s268, 8
        %s270 = scalar_lea.vmem %s4, %s269
        %s271 = smul.u32 16, %s23
        %s272 = smul.u32 16, %s24
        %p273 = scmp.lt.s32.totalorder %s272, 31
        %s274 = scalar_select %p273, %s272, 31
        %s275 = smul.addr %s274, 8
        %s276 = scalar_lea.vmem %s1, %s275
        %s277 = smul.u32 16, %s24
        %s278 = smul.u32 16, %s23
        %p279 = scmp.lt.s32.totalorder %s278, 31
        %s280 = scalar_select %p279, %s278, 31
        %s281 = smul.addr %s280, 8
        %s282 = scalar_lea.vmem %s2, %s281
        %s283 = smul.u32 16, %s23
        %s284 = smul.u32 16, %s23
        %p285 = scmp.lt.s32.totalorder %s284, 31
        %s286 = scalar_select %p285, %s284, 31
        %s287 = smul.addr %s286, 8
        %s288 = scalar_lea.vmem %s3, %s287
        %s289 = smul.u32 16, %s23
        %s290 = smul.u32 16, %s23
        %p291 = scmp.lt.s32.totalorder %s290, 31
        %s292 = scalar_select %p291, %s290, 31
        %s293 = smul.addr %s292, 8
        %s294 = scalar_lea.vmem %s4, %s293
        %s295 = smul.u32 16, %s23
        %p296 = scmp.eq.s32.totalorder %s24, 0
        // Predicated region
        $region37: #{_hyperconv_propagate.4} parent=31 // pred_check
          %p297 = pneg %p296
        $region38: #{_hyperconv_propagate.4} parent=31 // pred_check_branch
          %299 = sbr.rel (%p297) target = $region40
        $region39: #{_hyperconv_propagate.4} parent=31 // pred_region
          %300 = vst [vmem:[#allocation2] sm:$0xff] 0.0
          %301 = vst [vmem:[#allocation2 + $0x8] sm:$0xff] 0.0
          %302 = vst [vmem:[#allocation2 + $0x10] sm:$0xff] 0.0
          %303 = vst [vmem:[#allocation2 + $0x18] sm:$0xff] 0.0
          %304 = vst [vmem:[#allocation2 + $0x20] sm:$0xff] 0.0
          %305 = vst [vmem:[#allocation2 + $0x28] sm:$0xff] 0.0
          %306 = vst [vmem:[#allocation2 + $0x30] sm:$0xff] 0.0
          %307 = vst [vmem:[#allocation2 + $0x38] sm:$0xff] 0.0
          %308 = vst [vmem:[#allocation2 + $0x40] sm:$0xff] 0.0
          %309 = vst [vmem:[#allocation2 + $0x48] sm:$0xff] 0.0
          %310 = vst [vmem:[#allocation2 + $0x50] sm:$0xff] 0.0
          %311 = vst [vmem:[#allocation2 + $0x58] sm:$0xff] 0.0
          %312 = vst [vmem:[#allocation2 + $0x60] sm:$0xff] 0.0
          %313 = vst [vmem:[#allocation2 + $0x68] sm:$0xff] 0.0
          %314 = vst [vmem:[#allocation2 + $0x70] sm:$0xff] 0.0
          %315 = vst [vmem:[#allocation2 + $0x78] sm:$0xff] 0.0
        $region40: #{_hyperconv_propagate.4} parent=31 // pred_fallthru
          _
        %v316 = vld [vmem:[#allocation2] sm:$0xff]
        %v317 = vld [vmem:[#allocation2 + $0x8] sm:$0xff]
        %v318 = vld [vmem:[#allocation2 + $0x10] sm:$0xff]
        %v319 = vld [vmem:[#allocation2 + $0x18] sm:$0xff]
        %v320 = vld [vmem:[#allocation2 + $0x20] sm:$0xff]
        %v321 = vld [vmem:[#allocation2 + $0x28] sm:$0xff]
        %v322 = vld [vmem:[#allocation2 + $0x30] sm:$0xff]
        %v323 = vld [vmem:[#allocation2 + $0x38] sm:$0xff]
        %v324 = vld [vmem:[#allocation2 + $0x40] sm:$0xff]
        %v325 = vld [vmem:[#allocation2 + $0x48] sm:$0xff]
        %v326 = vld [vmem:[#allocation2 + $0x50] sm:$0xff]
        %v327 = vld [vmem:[#allocation2 + $0x58] sm:$0xff]
        %v328 = vld [vmem:[#allocation2 + $0x60] sm:$0xff]
        %v329 = vld [vmem:[#allocation2 + $0x68] sm:$0xff]
        %v330 = vld [vmem:[#allocation2 + $0x70] sm:$0xff]
        %v331 = vld [vmem:[#allocation2 + $0x78] sm:$0xff]
        %v332 = vld [vmem:[%s230] sm:$0xff]
        %v333 = vld [vmem:[%s230 + $0x8] sm:$0xff]
        %v334 = vld [vmem:[%s230 + $0x10] sm:$0xff]
        %v335 = vld [vmem:[%s230 + $0x18] sm:$0xff]
        %v336 = vld [vmem:[%s230 + $0x20] sm:$0xff]
        %v337 = vld [vmem:[%s230 + $0x28] sm:$0xff]
        %v338 = vld [vmem:[%s230 + $0x30] sm:$0xff]
        %v339 = vld [vmem:[%s230 + $0x38] sm:$0xff]
        %v340 = vld [vmem:[%s230 + $0x40] sm:$0xff]
        %v341 = vld [vmem:[%s230 + $0x48] sm:$0xff]
        %v342 = vld [vmem:[%s230 + $0x50] sm:$0xff]
        %v343 = vld [vmem:[%s230 + $0x58] sm:$0xff]
        %v344 = vld [vmem:[%s230 + $0x60] sm:$0xff]
        %v345 = vld [vmem:[%s230 + $0x68] sm:$0xff]
        %v346 = vld [vmem:[%s230 + $0x70] sm:$0xff]
        %v347 = vld [vmem:[%s230 + $0x78] sm:$0xff]
        %v348 = vld [vmem:[%s276] sm:$0xff]
        %v349 = vld [vmem:[%s276 + $0x8] sm:$0xff]
        %v350 = vld [vmem:[%s276 + $0x10] sm:$0xff]
        %v351 = vld [vmem:[%s276 + $0x18] sm:$0xff]
        %v352 = vld [vmem:[%s276 + $0x20] sm:$0xff]
        %v353 = vld [vmem:[%s276 + $0x28] sm:$0xff]
        %v354 = vld [vmem:[%s276 + $0x30] sm:$0xff]
        %v355 = vld [vmem:[%s276 + $0x38] sm:$0xff]
        %v356 = vld [vmem:[%s276 + $0x40] sm:$0xff]
        %v357 = vld [vmem:[%s276 + $0x48] sm:$0xff]
        %v358 = vld [vmem:[%s276 + $0x50] sm:$0xff]
        %v359 = vld [vmem:[%s276 + $0x58] sm:$0xff]
        %v360 = vld [vmem:[%s276 + $0x60] sm:$0xff]
        %v361 = vld [vmem:[%s276 + $0x68] sm:$0xff]
        %v362 = vld [vmem:[%s276 + $0x70] sm:$0xff]
        %v363 = vld [vmem:[%s276 + $0x78] sm:$0xff]
        %364 = vmatpush.msra.mxu0 %v363
        %365 = vmatpush.msra.mxu0 %v362
        %366 = vmatpush.msra.mxu0 %v361
        %367 = vmatpush.msra.mxu0 %v360
        %368 = vmatpush.msra.mxu0 %v359
        %369 = vmatpush.msra.mxu0 %v358
        %370 = vmatpush.msra.mxu0 %v357
        %371 = vmatpush.msra.mxu0 %v356
        %372 = vmatpush.msra.mxu0 %v355
        %373 = vmatpush.msra.mxu0 %v354
        %374 = vmatpush.msra.mxu0 %v353
        %375 = vmatpush.msra.mxu0 %v352
        %376 = vmatpush.msra.mxu0 %v351
        %377 = vmatpush.msra.mxu0 %v350
        %378 = vmatpush.msra.mxu0 %v349
        %379 = vmatpush.msra.mxu0 %v348
        %380 = vmatmul.f32.gmra.mxu0 %v332
        %v381 = vpop.f32.mrf.mxu0
        %v382 = vadd.f32 0.0, %v381
        %383 = vmatmul.f32.gmra.mxu0 %v333
        %v384 = vpop.f32.mrf.mxu0
        %v385 = vadd.f32 0.0, %v384
        %386 = vmatmul.f32.gmra.mxu0 %v334
        %v387 = vpop.f32.mrf.mxu0
        %v388 = vadd.f32 0.0, %v387
        %389 = vmatmul.f32.gmra.mxu0 %v335
        %v390 = vpop.f32.mrf.mxu0
        %v391 = vadd.f32 0.0, %v390
        %392 = vmatmul.f32.gmra.mxu0 %v336
        %v393 = vpop.f32.mrf.mxu0
        %v394 = vadd.f32 0.0, %v393
        %395 = vmatmul.f32.gmra.mxu0 %v337
        %v396 = vpop.f32.mrf.mxu0
        %v397 = vadd.f32 0.0, %v396
        %398 = vmatmul.f32.gmra.mxu0 %v338
        %v399 = vpop.f32.mrf.mxu0
        %v400 = vadd.f32 0.0, %v399
        %401 = vmatmul.f32.gmra.mxu0 %v339
        %v402 = vpop.f32.mrf.mxu0
        %v403 = vadd.f32 0.0, %v402
        %404 = vmatmul.f32.gmra.mxu0 %v340
        %v405 = vpop.f32.mrf.mxu0
        %v406 = vadd.f32 0.0, %v405
        %407 = vmatmul.f32.gmra.mxu0 %v341
        %v408 = vpop.f32.mrf.mxu0
        %v409 = vadd.f32 0.0, %v408
        %410 = vmatmul.f32.gmra.mxu0 %v342
        %v411 = vpop.f32.mrf.mxu0
        %v412 = vadd.f32 0.0, %v411
        %413 = vmatmul.f32.gmra.mxu0 %v343
        %v414 = vpop.f32.mrf.mxu0
        %v415 = vadd.f32 0.0, %v414
        %416 = vmatmul.f32.gmra.mxu0 %v344
        %v417 = vpop.f32.mrf.mxu0
        %v418 = vadd.f32 0.0, %v417
        %419 = vmatmul.f32.gmra.mxu0 %v345
        %v420 = vpop.f32.mrf.mxu0
        %v421 = vadd.f32 0.0, %v420
        %422 = vmatmul.f32.gmra.mxu0 %v346
        %v423 = vpop.f32.mrf.mxu0
        %v424 = vadd.f32 0.0, %v423
        %425 = vmatmul.f32.gmra.mxu0 %v347
        %v426 = vpop.f32.mrf.mxu0
        %v427 = vadd.f32 0.0, %v426
        %428 = vdwg.mxu0
        %v429 = vadd.f32 %v316, %v382
        %v430 = vadd.f32 %v317, %v385
        %v431 = vadd.f32 %v318, %v388
        %v432 = vadd.f32 %v319, %v391
        %v433 = vadd.f32 %v320, %v394
        %v434 = vadd.f32 %v321, %v397
        %v435 = vadd.f32 %v322, %v400
        %v436 = vadd.f32 %v323, %v403
        %v437 = vadd.f32 %v324, %v406
        %v438 = vadd.f32 %v325, %v409
        %v439 = vadd.f32 %v326, %v412
        %v440 = vadd.f32 %v327, %v415
        %v441 = vadd.f32 %v328, %v418
        %v442 = vadd.f32 %v329, %v421
        %v443 = vadd.f32 %v330, %v424
        %v444 = vadd.f32 %v331, %v427
        %445 = vst [vmem:[#allocation2] sm:$0xff] %v429
        %446 = vst [vmem:[#allocation2 + $0x8] sm:$0xff] %v430
        %447 = vst [vmem:[#allocation2 + $0x10] sm:$0xff] %v431
        %448 = vst [vmem:[#allocation2 + $0x18] sm:$0xff] %v432
        %449 = vst [vmem:[#allocation2 + $0x20] sm:$0xff] %v433
        %450 = vst [vmem:[#allocation2 + $0x28] sm:$0xff] %v434
        %451 = vst [vmem:[#allocation2 + $0x30] sm:$0xff] %v435
        %452 = vst [vmem:[#allocation2 + $0x38] sm:$0xff] %v436
        %453 = vst [vmem:[#allocation2 + $0x40] sm:$0xff] %v437
        %454 = vst [vmem:[#allocation2 + $0x48] sm:$0xff] %v438
        %455 = vst [vmem:[#allocation2 + $0x50] sm:$0xff] %v439
        %456 = vst [vmem:[#allocation2 + $0x58] sm:$0xff] %v440
        %457 = vst [vmem:[#allocation2 + $0x60] sm:$0xff] %v441
        %458 = vst [vmem:[#allocation2 + $0x68] sm:$0xff] %v442
        %459 = vst [vmem:[#allocation2 + $0x70] sm:$0xff] %v443
        %460 = vst [vmem:[#allocation2 + $0x78] sm:$0xff] %v444
        %p461 = scmp.eq.s32.totalorder %s24, 1
        // Predicated region
        $region41: #{_hyperconv_propagate.4} parent=31 // pred_check
          %p462 = pneg %p461
        $region42: #{_hyperconv_propagate.4} parent=31 // pred_check_branch
          %464 = sbr.rel (%p462) target = $region44
        $region43: #{_hyperconv_propagate.4} parent=31 // pred_region
          %v465 = vld [vmem:[#allocation2] sm:$0xff]
          %v466 = vld [vmem:[#allocation2 + $0x8] sm:$0xff]
          %v467 = vld [vmem:[#allocation2 + $0x10] sm:$0xff]
          %v468 = vld [vmem:[#allocation2 + $0x18] sm:$0xff]
          %v469 = vld [vmem:[#allocation2 + $0x20] sm:$0xff]
          %v470 = vld [vmem:[#allocation2 + $0x28] sm:$0xff]
          %v471 = vld [vmem:[#allocation2 + $0x30] sm:$0xff]
          %v472 = vld [vmem:[#allocation2 + $0x38] sm:$0xff]
          %v473 = vld [vmem:[#allocation2 + $0x40] sm:$0xff]
          %v474 = vld [vmem:[#allocation2 + $0x48] sm:$0xff]
          %v475 = vld [vmem:[#allocation2 + $0x50] sm:$0xff]
          %v476 = vld [vmem:[#allocation2 + $0x58] sm:$0xff]
          %v477 = vld [vmem:[#allocation2 + $0x60] sm:$0xff]
          %v478 = vld [vmem:[#allocation2 + $0x68] sm:$0xff]
          %v479 = vld [vmem:[#allocation2 + $0x70] sm:$0xff]
          %v480 = vld [vmem:[#allocation2 + $0x78] sm:$0xff]
          %481 = vst [vmem:[%s288] sm:$0xff] %v465
          %482 = vst [vmem:[%s288 + $0x8] sm:$0xff] %v466
          %483 = vst [vmem:[%s288 + $0x10] sm:$0xff] %v467
          %484 = vst [vmem:[%s288 + $0x18] sm:$0xff] %v468
          %485 = vst [vmem:[%s288 + $0x20] sm:$0xff] %v469
          %486 = vst [vmem:[%s288 + $0x28] sm:$0xff] %v470
          %487 = vst [vmem:[%s288 + $0x30] sm:$0xff] %v471
          %488 = vst [vmem:[%s288 + $0x38] sm:$0xff] %v472
          %489 = vst [vmem:[%s288 + $0x40] sm:$0xff] %v473
          %490 = vst [vmem:[%s288 + $0x48] sm:$0xff] %v474
          %491 = vst [vmem:[%s288 + $0x50] sm:$0xff] %v475
          %492 = vst [vmem:[%s288 + $0x58] sm:$0xff] %v476
          %493 = vst [vmem:[%s288 + $0x60] sm:$0xff] %v477
          %494 = vst [vmem:[%s288 + $0x68] sm:$0xff] %v478
          %495 = vst [vmem:[%s288 + $0x70] sm:$0xff] %v479
          %496 = vst [vmem:[%s288 + $0x78] sm:$0xff] %v480
          %v497 = vld [vmem:[%s282] sm:$0xff]
          %v498 = vld [vmem:[%s282 + $0x8] sm:$0xff]
          %v499 = vld [vmem:[%s282 + $0x10] sm:$0xff]
          %v500 = vld [vmem:[%s282 + $0x18] sm:$0xff]
          %v501 = vld [vmem:[%s282 + $0x20] sm:$0xff]
          %v502 = vld [vmem:[%s282 + $0x28] sm:$0xff]
          %v503 = vld [vmem:[%s282 + $0x30] sm:$0xff]
          %v504 = vld [vmem:[%s282 + $0x38] sm:$0xff]
          %v505 = vld [vmem:[%s282 + $0x40] sm:$0xff]
          %v506 = vld [vmem:[%s282 + $0x48] sm:$0xff]
          %v507 = vld [vmem:[%s282 + $0x50] sm:$0xff]
          %v508 = vld [vmem:[%s282 + $0x58] sm:$0xff]
          %v509 = vld [vmem:[%s282 + $0x60] sm:$0xff]
          %v510 = vld [vmem:[%s282 + $0x68] sm:$0xff]
          %v511 = vld [vmem:[%s282 + $0x70] sm:$0xff]
          %v512 = vld [vmem:[%s282 + $0x78] sm:$0xff]
          %v513 = vadd.f32 %v497, %v465
          %v514 = vadd.f32 %v498, %v466
          %v515 = vadd.f32 %v499, %v467
          %v516 = vadd.f32 %v500, %v468
          %v517 = vadd.f32 %v501, %v469
          %v518 = vadd.f32 %v502, %v470
          %v519 = vadd.f32 %v503, %v471
          %v520 = vadd.f32 %v504, %v472
          %v521 = vadd.f32 %v505, %v473
          %v522 = vadd.f32 %v506, %v474
          %v523 = vadd.f32 %v507, %v475
          %v524 = vadd.f32 %v508, %v476
          %v525 = vadd.f32 %v509, %v477
          %v526 = vadd.f32 %v510, %v478
          %v527 = vadd.f32 %v511, %v479
          %v528 = vadd.f32 %v512, %v480
          %529 = vst [vmem:[%s294] sm:$0xff] %v513
          %530 = vst [vmem:[%s294 + $0x8] sm:$0xff] %v514
          %531 = vst [vmem:[%s294 + $0x10] sm:$0xff] %v515
          %532 = vst [vmem:[%s294 + $0x18] sm:$0xff] %v516
          %533 = vst [vmem:[%s294 + $0x20] sm:$0xff] %v517
          %534 = vst [vmem:[%s294 + $0x28] sm:$0xff] %v518
          %535 = vst [vmem:[%s294 + $0x30] sm:$0xff] %v519
          %536 = vst [vmem:[%s294 + $0x38] sm:$0xff] %v520
          %537 = vst [vmem:[%s294 + $0x40] sm:$0xff] %v521
          %538 = vst [vmem:[%s294 + $0x48] sm:$0xff] %v522
          %539 = vst [vmem:[%s294 + $0x50] sm:$0xff] %v523
          %540 = vst [vmem:[%s294 + $0x58] sm:$0xff] %v524
          %541 = vst [vmem:[%s294 + $0x60] sm:$0xff] %v525
          %542 = vst [vmem:[%s294 + $0x68] sm:$0xff] %v526
          %543 = vst [vmem:[%s294 + $0x70] sm:$0xff] %v527
          %544 = vst [vmem:[%s294 + $0x78] sm:$0xff] %v528
        $region44: #{_hyperconv_propagate.4} parent=31 // pred_fallthru
          _
        %s545 = smul.u32 16, %s23
        %p546 = scmp.lt.s32.totalorder %s545, 31
        %s547 = scalar_select %p546, %s545, 31
        %s548 = smul.addr %s547, 8
        %s549 = scalar_lea.vmem %s3, %s548
        %s550 = smul.u32 16, %s23
        %p551 = scmp.lt.s32.totalorder %s550, 31
        %s552 = scalar_select %p551, %s550, 31
        %s553 = smul.addr %s552, 8
        %s554 = scalar_lea.vmem %s4, %s553
        // Predicated region
        $region45: #{_hyperconv_propagate.4} parent=31 // pred_check
          %p555 = pneg %p129
        $region46: #{_hyperconv_propagate.4} parent=31 // pred_check_branch
          %557 = sbr.rel (%p555) target = $region48
        $region47: #{_hyperconv_propagate.4} parent=31 // pred_region
          %s558 = smul.u32 16, %s23
        $region48: #{_hyperconv_propagate.4} parent=31 // pred_fallthru
          _
        // Predicated region
        $region49: #{_hyperconv_propagate.4} parent=31 // pred_check
          %p559 = pneg %p155
        $region50: #{_hyperconv_propagate.4} parent=31 // pred_check_branch
          %561 = sbr.rel (%p559) target = $region52
        $region51: #{_hyperconv_propagate.4} parent=31 // pred_region
          %s562 = smul.u32 16, %s23
        $region52: #{_hyperconv_propagate.4} parent=31 // pred_fallthru
          _
      $region32: #{_hyperconv_propagate.4} parent=5 // pred_fallthru
        _
      %p563 = scmp.le.s32.totalorder 2, %s14
      // Predicated region
      $region53: #{_hyperconv_propagate.4} parent=5 // pred_check
        %p564 = pneg %p563
      $region54: #{_hyperconv_propagate.4} parent=5 // pred_check_branch
        %566 = sbr.rel (%p564) target = $region56
      $region55: #{_hyperconv_propagate.4} parent=5 // pred_region
        %s567 = ssub.s32 %s14, 2
        // Predicated region
        $region57: #{_hyperconv_propagate.4} parent=55 // pred_check
          %p568 = pneg %p135
        $region58: #{_hyperconv_propagate.4} parent=55 // pred_check_branch
          %570 = sbr.rel (%p568) target = $region60
        $region59: #{_hyperconv_propagate.4} parent=55 // pred_region
          %s571 = smul.u32 16, %s25
          %p572 = scmp.lt.s32.totalorder %s571, 31
          %s573 = scalar_select %p572, %s571, 31
          %s574 = smul.addr %s573, 8
          %s575 = scalar_lea.vmem %s3, %s574
        $region60: #{_hyperconv_propagate.4} parent=55 // pred_fallthru
          _
        // Predicated region
        $region61: #{_hyperconv_propagate.4} parent=55 // pred_check
          %p576 = pneg %p161
        $region62: #{_hyperconv_propagate.4} parent=55 // pred_check_branch
          %578 = sbr.rel (%p576) target = $region64
        $region63: #{_hyperconv_propagate.4} parent=55 // pred_region
          %s579 = smul.u32 16, %s25
          %p580 = scmp.lt.s32.totalorder %s579, 31
          %s581 = scalar_select %p580, %s579, 31
          %s582 = smul.addr %s581, 8
          %s583 = scalar_lea.vmem %s4, %s582
        $region64: #{_hyperconv_propagate.4} parent=55 // pred_fallthru
          _
      $region56: #{_hyperconv_propagate.4} parent=5 // pred_fallthru
        _
    $region6: #{_hyperconv_propagate.4} parent=1 // loop_footer
      %s18 = sadd.s32 1, %s14
    $region7: #{_hyperconv_propagate.4} parent=1 // loop_footer_branch
      %13 = sbr.rel target = $region3
    $region8: #{_hyperconv_propagate.4} parent=1 // loop_exit
      _
    %584 = vsyncpa [#allocation4], 1
    %s585 = scalar_lea.sflag [#allocation4], 1
    %586 = vsyncpa %s585, 1

// kernel: _hyperconv_propagate.5
$region0: #{_hyperconv_propagate.5}
  #allocation0 [shape = 'u32[]', space=smem, size = 0x4, offset = 0x4, fixed_abs, tag = 'smem constant byte address 0x4 - core index']
  #allocation1 [shape = 'u32[72,128]{1,0:T(1,128)}', space=vmem, size = 0x9000, scoped, tag = 'internal scratch']
  #allocation2 [shape = 'f32[128,128]{1,0:T(8,128)}', space=vmem, size = 0x10000, scoped, tag = 'scratch operand']
  %s0 = inlined_call_operand.hbm [shape: f32[256,256], index: 0, kind: input, shape index: {}]
  %s1 = inlined_call_operand.vmem [shape: f32[256,128], index: 1, kind: input, shape index: {}]
  %s2 = inlined_call_operand.vmem [shape: f32[256,128], index: 2, kind: input, shape index: {}]
  %s3 = inlined_call_operand.hbm [shape: f32[256,128], index: 3, kind: output, shape index: {0}]
  %s4 = inlined_call_operand.hbm [shape: f32[256,128], index: 4, kind: output, shape index: {1}]
  %5 = xla_tuple %s3, %s4
  %s6 = sld [smem:[#allocation0]]
  $region65: #{_hyperconv_propagate.5} parent=0
    _
  %s8 = ssub.s32 1, %s6
  %s9 = scalar_select 0, %s8, %s6
  $region1: #{_hyperconv_propagate.5} parent=0
    #allocation3 [shape = 'u8[131072]{0}', space=vmem, size = 0x20000, scoped, tag = 'input window, operand 0']
    #allocation4 [shape = 's32[2]{0}', space=sflag, size = 0x8, scoped, tag = 'scoped memory for _hyperconv_propagate.5']
    #allocation5 [shape = 's32[2]{0}', space=sflag, size = 0x8, scoped, tag = 'scoped memory for _hyperconv_propagate.5']
    #allocation6 [shape = 'u8[131072]{0}', space=vmem, size = 0x20000, scoped, tag = 'output window, operand 0']
    #allocation7 [shape = 'u8[131072]{0}', space=vmem, size = 0x20000, scoped, tag = 'output window, operand 1']
    #allocation8 [shape = 's32[2]{0}', space=sflag, size = 0x8, scoped, tag = 'scoped memory for _hyperconv_propagate.5']
    %10 = vsyncpa [#allocation4], 0
    %s11 = scalar_lea.sflag [#allocation4], 1
    %12 = vsyncpa %s11, 0
    %13 = vsyncpa [#allocation5], 0
    %s14 = scalar_lea.sflag [#allocation5], 1
    %15 = vsyncpa %s14, 0
    %16 = vsyncpa [#allocation8], 0
    %s17 = scalar_lea.sflag [#allocation8], 1
    %18 = vsyncpa %s17, 0
    loop: start=0, step=1, limit=6
    $region2: #{_hyperconv_propagate.5} parent=1 // loop_pre_header
      _
    $region3: #{_hyperconv_propagate.5} parent=1 // loop_header
      %s20 = sphi 0, %s24
      %p21 = scmp.ge.s32.totalorder %s20, 6
      %s27 = sphi 0, %s39
      %s28 = sphi 0, %s35
      %s29 = sphi 0, %s27
      %s30 = sphi 0, %s28
      %s31 = sphi 0, %s29
      %s32 = sphi 0, %s30
      %s44 = sphi 0, %s46
      %s47 = sphi 0, %s44
      %s48 = sphi 0, %s47
      %s64 = sphi 0, %s48
      %s70 = sphi 0, %s72
      %s73 = sphi 0, %s70
      %s74 = sphi 0, %s73
      %s90 = sphi 0, %s74
      %s96 = sphi 0, %s98
      %s99 = sphi 0, %s96
      %s100 = sphi 0, %s99
      %s116 = sphi 0, %s100
      %s122 = sphi 0, %s124
      %s125 = sphi 0, %s122
      %s126 = sphi 0, %s125
      %s142 = sphi 0, %s126
      %s148 = sphi 0, %s150
      %s151 = sphi 0, %s148
      %s152 = sphi 0, %s151
      %s168 = sphi 0, %s152
    $region4: #{_hyperconv_propagate.5} parent=1 // loop_header_branch
      %23 = sbr.rel (%p21) target = $region8
    $region5: #{_hyperconv_propagate.5} parent=1 // loop_body
      %s25 = ssub.s32 %s20, 1
      %s26 = ssub.s32 %s20, 2
      %s33 = sadd.s32 1, %s28
      %p34 = scmp.ge.s32.totalorder %s33, 2
      %s35 = scalar_select %p34, 0, %s33
      %s36 = sadd.s32 1, %s27
      %s37 = scalar_select %p34, %s36, %s27
      %p38 = scmp.ge.s32.totalorder %s37, 2
      %s39 = scalar_select %p38, 0, %s37
      %s40 = ssub.s32 %s27, %s39
      %s41 = ssub.s32 %s28, %s35
      %s42 = sor.u32 %s40, %s41
      %p43 = scmp.eq.s32.totalorder %s42, 0
      %s45 = sadd.s32 %s44, 1
      %s46 = scalar_select %p43, %s44, %s45
      %p49 = pneg %p43
      %p50 = scmp.eq.s32.totalorder %s20, 3
      %p51 = por %p49, %p50
      %p52 = scmp.ne.s32.totalorder %s44, %s47
      %p53 = scmp.eq.s32.totalorder %s20, 0
      %p54 = por %p52, %p53
      %p55 = scmp.ne.s32.totalorder %s44, %s47
      %p56 = scmp.eq.s32.totalorder %s25, 3
      %p57 = por %p55, %p56
      %p58 = scmp.ne.s32.totalorder %s47, %s48
      %p59 = scmp.eq.s32.totalorder %s25, 0
      %p60 = por %p58, %p59
      %p61 = scmp.ne.s32.totalorder %s47, %s48
      %p62 = scmp.eq.s32.totalorder %s26, 3
      %p63 = por %p61, %p62
      %p65 = scmp.ne.s32.totalorder %s48, %s64
      %p66 = scmp.eq.s32.totalorder %s26, 0
      %p67 = por %p65, %p66
      %s68 = ssub.s32 %s28, %s35
      %p69 = scmp.eq.s32.totalorder %s68, 0
      %s71 = sadd.s32 %s70, 1
      %s72 = scalar_select %p69, %s70, %s71
      %p75 = pneg %p69
      %p76 = scmp.eq.s32.totalorder %s20, 3
      %p77 = por %p75, %p76
      %p78 = scmp.ne.s32.totalorder %s70, %s73
      %p79 = scmp.eq.s32.totalorder %s20, 0
      %p80 = por %p78, %p79
      %p81 = scmp.ne.s32.totalorder %s70, %s73
      %p82 = scmp.eq.s32.totalorder %s25, 3
      %p83 = por %p81, %p82
      %p84 = scmp.ne.s32.totalorder %s73, %s74
      %p85 = scmp.eq.s32.totalorder %s25, 0
      %p86 = por %p84, %p85
      %p87 = scmp.ne.s32.totalorder %s73, %s74
      %p88 = scmp.eq.s32.totalorder %s26, 3
      %p89 = por %p87, %p88
      %p91 = scmp.ne.s32.totalorder %s74, %s90
      %p92 = scmp.eq.s32.totalorder %s26, 0
      %p93 = por %p91, %p92
      %s94 = ssub.s32 %s27, %s39
      %p95 = scmp.eq.s32.totalorder %s94, 0
      %s97 = sadd.s32 %s96, 1
      %s98 = scalar_select %p95, %s96, %s97
      %p101 = pneg %p95
      %p102 = scmp.eq.s32.totalorder %s20, 3
      %p103 = por %p101, %p102
      %p104 = scmp.ne.s32.totalorder %s96, %s99
      %p105 = scmp.eq.s32.totalorder %s20, 0
      %p106 = por %p104, %p105
      %p107 = scmp.ne.s32.totalorder %s96, %s99
      %p108 = scmp.eq.s32.totalorder %s25, 3
      %p109 = por %p107, %p108
      %p110 = scmp.ne.s32.totalorder %s99, %s100
      %p111 = scmp.eq.s32.totalorder %s25, 0
      %p112 = por %p110, %p111
      %p113 = scmp.ne.s32.totalorder %s99, %s100
      %p114 = scmp.eq.s32.totalorder %s26, 3
      %p115 = por %p113, %p114
      %p117 = scmp.ne.s32.totalorder %s100, %s116
      %p118 = scmp.eq.s32.totalorder %s26, 0
      %p119 = por %p117, %p118
      %s120 = ssub.s32 %s27, %s39
      %p121 = scmp.eq.s32.totalorder %s120, 0
      %s123 = sadd.s32 %s122, 1
      %s124 = scalar_select %p121, %s122, %s123
      %p127 = pneg %p121
      %p128 = scmp.eq.s32.totalorder %s20, 3
      %p129 = por %p127, %p128
      %p130 = scmp.ne.s32.totalorder %s122, %s125
      %p131 = scmp.eq.s32.totalorder %s20, 0
      %p132 = por %p130, %p131
      %p133 = scmp.ne.s32.totalorder %s122, %s125
      %p134 = scmp.eq.s32.totalorder %s25, 3
      %p135 = por %p133, %p134
      %p136 = scmp.ne.s32.totalorder %s125, %s126
      %p137 = scmp.eq.s32.totalorder %s25, 0
      %p138 = por %p136, %p137
      %p139 = scmp.ne.s32.totalorder %s125, %s126
      %p140 = scmp.eq.s32.totalorder %s26, 3
      %p141 = por %p139, %p140
      %p143 = scmp.ne.s32.totalorder %s126, %s142
      %p144 = scmp.eq.s32.totalorder %s26, 0
      %p145 = por %p143, %p144
      %s146 = ssub.s32 %s27, %s39
      %p147 = scmp.eq.s32.totalorder %s146, 0
      %s149 = sadd.s32 %s148, 1
      %s150 = scalar_select %p147, %s148, %s149
      %p153 = pneg %p147
      %p154 = scmp.eq.s32.totalorder %s20, 3
      %p155 = por %p153, %p154
      %p156 = scmp.ne.s32.totalorder %s148, %s151
      %p157 = scmp.eq.s32.totalorder %s20, 0
      %p158 = por %p156, %p157
      %p159 = scmp.ne.s32.totalorder %s148, %s151
      %p160 = scmp.eq.s32.totalorder %s25, 3
      %p161 = por %p159, %p160
      %p162 = scmp.ne.s32.totalorder %s151, %s152
      %p163 = scmp.eq.s32.totalorder %s25, 0
      %p164 = por %p162, %p163
      %p165 = scmp.ne.s32.totalorder %s151, %s152
      %p166 = scmp.eq.s32.totalorder %s26, 3
      %p167 = por %p165, %p166
      %p169 = scmp.ne.s32.totalorder %s152, %s168
      %p170 = scmp.eq.s32.totalorder %s26, 0
      %p171 = por %p169, %p170
      %p172 = scmp.le.s32.totalorder 1, %s20
      %p173 = scmp.lt.s32.totalorder %s20, 5
      %p174 = pnand %p172, %p173
      %p175 = pneg %p174
      // Predicated region
      $region9: #{_hyperconv_propagate.5} parent=5 // pred_check
        _
      $region10: #{_hyperconv_propagate.5} parent=5 // pred_check_branch
        %177 = sbr.rel (%p174) target = $region12
      $region11: #{_hyperconv_propagate.5} parent=5 // pred_region
        %s178 = ssub.s32 %s20, 1
      $region12: #{_hyperconv_propagate.5} parent=5 // pred_fallthru
        _
      %p179 = scmp.lt.s32.totalorder %s20, 4
      // Predicated region
      $region13: #{_hyperconv_propagate.5} parent=5 // pred_check
        %p180 = pneg %p179
      $region14: #{_hyperconv_propagate.5} parent=5 // pred_check_branch
        %182 = sbr.rel (%p180) target = $region16
      $region15: #{_hyperconv_propagate.5} parent=5 // pred_region
        // Predicated region
        $region17: #{_hyperconv_propagate.5} parent=15 // pred_check
          %p183 = pneg %p54
        $region18: #{_hyperconv_propagate.5} parent=15 // pred_check_branch
          %185 = sbr.rel (%p183) target = $region20
        $region19: #{_hyperconv_propagate.5} parent=15 // pred_region
          %s186 = sand.u32 %s44, 1
          %s187 = scalar_lea.sflag [#allocation4], %s186
          %s188 = sand.u32 %s44, 1
          %s189 = smul.addr %s188, 128
          %s190 = scalar_lea.vmem [#allocation3], %s189
          %s191 = smul.u32 16, %s27
          %193 = vsyncadd %s187, 0
          %s194 = smul.addr %s191, 2
          %s195 = sadd.s32 %s28, %s194
          %s196 = smul.addr %s195, 8
          %s197 = scalar_lea.hbm %s0, %s196
          %s198 = sshll.u32 %s197, 4
          %s199 = int_to_ptr.hbm [resolvable:$true] %s198
          %s200 = sshll.u32 %s190, 4
          %s201 = int_to_ptr.vmem [resolvable:$true] %s200
          %206 = dma.hbm_to_vmem [thread:$0]  %s199, 2048, %s201, %s187, 256, 128, 8
        $region20: #{_hyperconv_propagate.5} parent=15 // pred_fallthru
          _
        // Predicated region
        $region21: #{_hyperconv_propagate.5} parent=15 // pred_check
          %p207 = pneg %p80
        $region22: #{_hyperconv_propagate.5} parent=15 // pred_check_branch
          %209 = sbr.rel (%p207) target = $region24
        $region23: #{_hyperconv_propagate.5} parent=15 // pred_region
          %s210 = smul.u32 16, %s28
          %p211 = scmp.lt.s32.totalorder %s210, 31
          %s212 = scalar_select %p211, %s210, 31
          %s213 = smul.addr %s212, 8
          %s214 = scalar_lea.vmem %s1, %s213
          %s215 = smul.u32 16, %s28
        $region24: #{_hyperconv_propagate.5} parent=15 // pred_fallthru
          _
        // Predicated region
        $region25: #{_hyperconv_propagate.5} parent=15 // pred_check
          %p216 = pneg %p106
        $region26: #{_hyperconv_propagate.5} parent=15 // pred_check_branch
          %218 = sbr.rel (%p216) target = $region28
        $region27: #{_hyperconv_propagate.5} parent=15 // pred_region
          %s219 = smul.u32 16, %s27
          %p220 = scmp.lt.s32.totalorder %s219, 31
          %s221 = scalar_select %p220, %s219, 31
          %s222 = smul.addr %s221, 8
          %s223 = scalar_lea.vmem %s2, %s222
          %s224 = smul.u32 16, %s27
        $region28: #{_hyperconv_propagate.5} parent=15 // pred_fallthru
          _
      $region16: #{_hyperconv_propagate.5} parent=5 // pred_fallthru
        _
      %p225 = scmp.le.s32.totalorder 1, %s20
      %p226 = scmp.lt.s32.totalorder %s20, 5
      %p227 = pnand %p225, %p226
      %p228 = pneg %p227
      // Predicated region
      $region29: #{_hyperconv_propagate.5} parent=5 // pred_check
        _
      $region30: #{_hyperconv_propagate.5} parent=5 // pred_check_branch
        %230 = sbr.rel (%p227) target = $region32
      $region31: #{_hyperconv_propagate.5} parent=5 // pred_region
        %s231 = ssub.s32 %s20, 1
        %s232 = sand.u32 %s47, 1
        %s233 = scalar_lea.sflag [#allocation4], %s232
        %s234 = sand.u32 %s47, 1
        %s235 = smul.addr %s234, 128
        %s236 = scalar_lea.vmem [#allocation3], %s235
        // Predicated region
        $region33: #{_hyperconv_propagate.5} parent=31 // pred_check
          %p237 = pneg %p60
        $region34: #{_hyperconv_propagate.5} parent=31 // pred_check_branch
          %239 = sbr.rel (%p237) target = $region36
        $region35: #{_hyperconv_propagate.5} parent=31 // pred_region
          %241 = dma.done %s233, 2048
        $region36: #{_hyperconv_propagate.5} parent=31 // pred_fallthru
          _
        %s242 = sand.u32 %s47, 1
        %s243 = scalar_lea.sflag [#allocation4], %s242
        %s244 = sand.u32 %s47, 1
        %s245 = smul.addr %s244, 128
        %s246 = scalar_lea.vmem [#allocation3], %s245
        %p247 = pneg %p60
        %p248 = pneg %p57
        %s249 = smul.u32 16, %s30
        %p250 = scmp.lt.s32.totalorder %s249, 31
        %s251 = scalar_select %p250, %s249, 31
        %s252 = smul.addr %s251, 8
        %s253 = scalar_lea.vmem %s1, %s252
        %p254 = pneg %p86
        %p255 = pneg %p83
        %s256 = smul.u32 16, %s29
        %p257 = scmp.lt.s32.totalorder %s256, 31
        %s258 = scalar_select %p257, %s256, 31
        %s259 = smul.addr %s258, 8
        %s260 = scalar_lea.vmem %s2, %s259
        %p261 = pneg %p112
        %p262 = pneg %p109
        %p263 = pneg %p138
        %p264 = pneg %p135
        %s265 = sand.u32 %s125, 1
        %s266 = scalar_lea.sflag [#allocation5], %s265
        %s267 = sand.u32 %s125, 1
        %s268 = smul.addr %s267, 128
        %s269 = scalar_lea.vmem [#allocation6], %s268
        %p270 = pneg %p164
        %p271 = pneg %p161
        %s272 = sand.u32 %s151, 1
        %s273 = scalar_lea.sflag [#allocation8], %s272
        %s274 = sand.u32 %s151, 1
        %s275 = smul.addr %s274, 128
        %s276 = scalar_lea.vmem [#allocation7], %s275
        %s277 = smul.u32 16, %s29
        %s278 = smul.u32 16, %s30
        %p279 = scmp.lt.s32.totalorder %s278, 31
        %s280 = scalar_select %p279, %s278, 31
        %s281 = smul.addr %s280, 8
        %s282 = scalar_lea.vmem %s1, %s281
        %s283 = smul.u32 16, %s30
        %s284 = smul.u32 16, %s29
        %p285 = scmp.lt.s32.totalorder %s284, 31
        %s286 = scalar_select %p285, %s284, 31
        %s287 = smul.addr %s286, 8
        %s288 = scalar_lea.vmem %s2, %s287
        %s289 = smul.u32 16, %s29
        %s290 = smul.u32 16, %s29
        %s291 = smul.u32 16, %s29
        %p292 = scmp.eq.s32.totalorder %s30, 0
        // Predicated region
        $region37: #{_hyperconv_propagate.5} parent=31 // pred_check
          %p293 = pneg %p292
        $region38: #{_hyperconv_propagate.5} parent=31 // pred_check_branch
          %295 = sbr.rel (%p293) target = $region40
        $region39: #{_hyperconv_propagate.5} parent=31 // pred_region
          %296 = vst [vmem:[#allocation2] sm:$0xff] 0.0
          %297 = vst [vmem:[#allocation2 + $0x8] sm:$0xff] 0.0
          %298 = vst [vmem:[#allocation2 + $0x10] sm:$0xff] 0.0
          %299 = vst [vmem:[#allocation2 + $0x18] sm:$0xff] 0.0
          %300 = vst [vmem:[#allocation2 + $0x20] sm:$0xff] 0.0
          %301 = vst [vmem:[#allocation2 + $0x28] sm:$0xff] 0.0
          %302 = vst [vmem:[#allocation2 + $0x30] sm:$0xff] 0.0
          %303 = vst [vmem:[#allocation2 + $0x38] sm:$0xff] 0.0
          %304 = vst [vmem:[#allocation2 + $0x40] sm:$0xff] 0.0
          %305 = vst [vmem:[#allocation2 + $0x48] sm:$0xff] 0.0
          %306 = vst [vmem:[#allocation2 + $0x50] sm:$0xff] 0.0
          %307 = vst [vmem:[#allocation2 + $0x58] sm:$0xff] 0.0
          %308 = vst [vmem:[#allocation2 + $0x60] sm:$0xff] 0.0
          %309 = vst [vmem:[#allocation2 + $0x68] sm:$0xff] 0.0
          %310 = vst [vmem:[#allocation2 + $0x70] sm:$0xff] 0.0
          %311 = vst [vmem:[#allocation2 + $0x78] sm:$0xff] 0.0
        $region40: #{_hyperconv_propagate.5} parent=31 // pred_fallthru
          _
        %v312 = vld [vmem:[#allocation2] sm:$0xff]
        %v313 = vld [vmem:[#allocation2 + $0x8] sm:$0xff]
        %v314 = vld [vmem:[#allocation2 + $0x10] sm:$0xff]
        %v315 = vld [vmem:[#allocation2 + $0x18] sm:$0xff]
        %v316 = vld [vmem:[#allocation2 + $0x20] sm:$0xff]
        %v317 = vld [vmem:[#allocation2 + $0x28] sm:$0xff]
        %v318 = vld [vmem:[#allocation2 + $0x30] sm:$0xff]
        %v319 = vld [vmem:[#allocation2 + $0x38] sm:$0xff]
        %v320 = vld [vmem:[#allocation2 + $0x40] sm:$0xff]
        %v321 = vld [vmem:[#allocation2 + $0x48] sm:$0xff]
        %v322 = vld [vmem:[#allocation2 + $0x50] sm:$0xff]
        %v323 = vld [vmem:[#allocation2 + $0x58] sm:$0xff]
        %v324 = vld [vmem:[#allocation2 + $0x60] sm:$0xff]
        %v325 = vld [vmem:[#allocation2 + $0x68] sm:$0xff]
        %v326 = vld [vmem:[#allocation2 + $0x70] sm:$0xff]
        %v327 = vld [vmem:[#allocation2 + $0x78] sm:$0xff]
        %v328 = vld [vmem:[%s236] sm:$0xff]
        %v329 = vld [vmem:[%s236 + $0x8] sm:$0xff]
        %v330 = vld [vmem:[%s236 + $0x10] sm:$0xff]
        %v331 = vld [vmem:[%s236 + $0x18] sm:$0xff]
        %v332 = vld [vmem:[%s236 + $0x20] sm:$0xff]
        %v333 = vld [vmem:[%s236 + $0x28] sm:$0xff]
        %v334 = vld [vmem:[%s236 + $0x30] sm:$0xff]
        %v335 = vld [vmem:[%s236 + $0x38] sm:$0xff]
        %v336 = vld [vmem:[%s236 + $0x40] sm:$0xff]
        %v337 = vld [vmem:[%s236 + $0x48] sm:$0xff]
        %v338 = vld [vmem:[%s236 + $0x50] sm:$0xff]
        %v339 = vld [vmem:[%s236 + $0x58] sm:$0xff]
        %v340 = vld [vmem:[%s236 + $0x60] sm:$0xff]
        %v341 = vld [vmem:[%s236 + $0x68] sm:$0xff]
        %v342 = vld [vmem:[%s236 + $0x70] sm:$0xff]
        %v343 = vld [vmem:[%s236 + $0x78] sm:$0xff]
        %v344 = vld [vmem:[%s282] sm:$0xff]
        %v345 = vld [vmem:[%s282 + $0x8] sm:$0xff]
        %v346 = vld [vmem:[%s282 + $0x10] sm:$0xff]
        %v347 = vld [vmem:[%s282 + $0x18] sm:$0xff]
        %v348 = vld [vmem:[%s282 + $0x20] sm:$0xff]
        %v349 = vld [vmem:[%s282 + $0x28] sm:$0xff]
        %v350 = vld [vmem:[%s282 + $0x30] sm:$0xff]
        %v351 = vld [vmem:[%s282 + $0x38] sm:$0xff]
        %v352 = vld [vmem:[%s282 + $0x40] sm:$0xff]
        %v353 = vld [vmem:[%s282 + $0x48] sm:$0xff]
        %v354 = vld [vmem:[%s282 + $0x50] sm:$0xff]
        %v355 = vld [vmem:[%s282 + $0x58] sm:$0xff]
        %v356 = vld [vmem:[%s282 + $0x60] sm:$0xff]
        %v357 = vld [vmem:[%s282 + $0x68] sm:$0xff]
        %v358 = vld [vmem:[%s282 + $0x70] sm:$0xff]
        %v359 = vld [vmem:[%s282 + $0x78] sm:$0xff]
        %360 = vmatpush.msra.mxu0 %v359
        %361 = vmatpush.msra.mxu0 %v358
        %362 = vmatpush.msra.mxu0 %v357
        %363 = vmatpush.msra.mxu0 %v356
        %364 = vmatpush.msra.mxu0 %v355
        %365 = vmatpush.msra.mxu0 %v354
        %366 = vmatpush.msra.mxu0 %v353
        %367 = vmatpush.msra.mxu0 %v352
        %368 = vmatpush.msra.mxu0 %v351
        %369 = vmatpush.msra.mxu0 %v350
        %370 = vmatpush.msra.mxu0 %v349
        %371 = vmatpush.msra.mxu0 %v348
        %372 = vmatpush.msra.mxu0 %v347
        %373 = vmatpush.msra.mxu0 %v346
        %374 = vmatpush.msra.mxu0 %v345
        %375 = vmatpush.msra.mxu0 %v344
        %376 = vmatmul.f32.gmra.mxu0 %v328
        %v377 = vpop.f32.mrf.mxu0
        %v378 = vadd.f32 0.0, %v377
        %379 = vmatmul.f32.gmra.mxu0 %v329
        %v380 = vpop.f32.mrf.mxu0
        %v381 = vadd.f32 0.0, %v380
        %382 = vmatmul.f32.gmra.mxu0 %v330
        %v383 = vpop.f32.mrf.mxu0
        %v384 = vadd.f32 0.0, %v383
        %385 = vmatmul.f32.gmra.mxu0 %v331
        %v386 = vpop.f32.mrf.mxu0
        %v387 = vadd.f32 0.0, %v386
        %388 = vmatmul.f32.gmra.mxu0 %v332
        %v389 = vpop.f32.mrf.mxu0
        %v390 = vadd.f32 0.0, %v389
        %391 = vmatmul.f32.gmra.mxu0 %v333
        %v392 = vpop.f32.mrf.mxu0
        %v393 = vadd.f32 0.0, %v392
        %394 = vmatmul.f32.gmra.mxu0 %v334
        %v395 = vpop.f32.mrf.mxu0
        %v396 = vadd.f32 0.0, %v395
        %397 = vmatmul.f32.gmra.mxu0 %v335
        %v398 = vpop.f32.mrf.mxu0
        %v399 = vadd.f32 0.0, %v398
        %400 = vmatmul.f32.gmra.mxu0 %v336
        %v401 = vpop.f32.mrf.mxu0
        %v402 = vadd.f32 0.0, %v401
        %403 = vmatmul.f32.gmra.mxu0 %v337
        %v404 = vpop.f32.mrf.mxu0
        %v405 = vadd.f32 0.0, %v404
        %406 = vmatmul.f32.gmra.mxu0 %v338
        %v407 = vpop.f32.mrf.mxu0
        %v408 = vadd.f32 0.0, %v407
        %409 = vmatmul.f32.gmra.mxu0 %v339
        %v410 = vpop.f32.mrf.mxu0
        %v411 = vadd.f32 0.0, %v410
        %412 = vmatmul.f32.gmra.mxu0 %v340
        %v413 = vpop.f32.mrf.mxu0
        %v414 = vadd.f32 0.0, %v413
        %415 = vmatmul.f32.gmra.mxu0 %v341
        %v416 = vpop.f32.mrf.mxu0
        %v417 = vadd.f32 0.0, %v416
        %418 = vmatmul.f32.gmra.mxu0 %v342
        %v419 = vpop.f32.mrf.mxu0
        %v420 = vadd.f32 0.0, %v419
        %421 = vmatmul.f32.gmra.mxu0 %v343
        %v422 = vpop.f32.mrf.mxu0
        %v423 = vadd.f32 0.0, %v422
        %424 = vdwg.mxu0
        %v425 = vadd.f32 %v312, %v378
        %v426 = vadd.f32 %v313, %v381
        %v427 = vadd.f32 %v314, %v384
        %v428 = vadd.f32 %v315, %v387
        %v429 = vadd.f32 %v316, %v390
        %v430 = vadd.f32 %v317, %v393
        %v431 = vadd.f32 %v318, %v396
        %v432 = vadd.f32 %v319, %v399
        %v433 = vadd.f32 %v320, %v402
        %v434 = vadd.f32 %v321, %v405
        %v435 = vadd.f32 %v322, %v408
        %v436 = vadd.f32 %v323, %v411
        %v437 = vadd.f32 %v324, %v414
        %v438 = vadd.f32 %v325, %v417
        %v439 = vadd.f32 %v326, %v420
        %v440 = vadd.f32 %v327, %v423
        %441 = vst [vmem:[#allocation2] sm:$0xff] %v425
        %442 = vst [vmem:[#allocation2 + $0x8] sm:$0xff] %v426
        %443 = vst [vmem:[#allocation2 + $0x10] sm:$0xff] %v427
        %444 = vst [vmem:[#allocation2 + $0x18] sm:$0xff] %v428
        %445 = vst [vmem:[#allocation2 + $0x20] sm:$0xff] %v429
        %446 = vst [vmem:[#allocation2 + $0x28] sm:$0xff] %v430
        %447 = vst [vmem:[#allocation2 + $0x30] sm:$0xff] %v431
        %448 = vst [vmem:[#allocation2 + $0x38] sm:$0xff] %v432
        %449 = vst [vmem:[#allocation2 + $0x40] sm:$0xff] %v433
        %450 = vst [vmem:[#allocation2 + $0x48] sm:$0xff] %v434
        %451 = vst [vmem:[#allocation2 + $0x50] sm:$0xff] %v435
        %452 = vst [vmem:[#allocation2 + $0x58] sm:$0xff] %v436
        %453 = vst [vmem:[#allocation2 + $0x60] sm:$0xff] %v437
        %454 = vst [vmem:[#allocation2 + $0x68] sm:$0xff] %v438
        %455 = vst [vmem:[#allocation2 + $0x70] sm:$0xff] %v439
        %456 = vst [vmem:[#allocation2 + $0x78] sm:$0xff] %v440
        %p457 = scmp.eq.s32.totalorder %s30, 1
        // Predicated region
        $region41: #{_hyperconv_propagate.5} parent=31 // pred_check
          %p458 = pneg %p457
        $region42: #{_hyperconv_propagate.5} parent=31 // pred_check_branch
          %460 = sbr.rel (%p458) target = $region44
        $region43: #{_hyperconv_propagate.5} parent=31 // pred_region
          %v461 = vld [vmem:[#allocation2] sm:$0xff]
          %v462 = vld [vmem:[#allocation2 + $0x8] sm:$0xff]
          %v463 = vld [vmem:[#allocation2 + $0x10] sm:$0xff]
          %v464 = vld [vmem:[#allocation2 + $0x18] sm:$0xff]
          %v465 = vld [vmem:[#allocation2 + $0x20] sm:$0xff]
          %v466 = vld [vmem:[#allocation2 + $0x28] sm:$0xff]
          %v467 = vld [vmem:[#allocation2 + $0x30] sm:$0xff]
          %v468 = vld [vmem:[#allocation2 + $0x38] sm:$0xff]
          %v469 = vld [vmem:[#allocation2 + $0x40] sm:$0xff]
          %v470 = vld [vmem:[#allocation2 + $0x48] sm:$0xff]
          %v471 = vld [vmem:[#allocation2 + $0x50] sm:$0xff]
          %v472 = vld [vmem:[#allocation2 + $0x58] sm:$0xff]
          %v473 = vld [vmem:[#allocation2 + $0x60] sm:$0xff]
          %v474 = vld [vmem:[#allocation2 + $0x68] sm:$0xff]
          %v475 = vld [vmem:[#allocation2 + $0x70] sm:$0xff]
          %v476 = vld [vmem:[#allocation2 + $0x78] sm:$0xff]
          %477 = vst [vmem:[%s269] sm:$0xff] %v461
          %478 = vst [vmem:[%s269 + $0x8] sm:$0xff] %v462
          %479 = vst [vmem:[%s269 + $0x10] sm:$0xff] %v463
          %480 = vst [vmem:[%s269 + $0x18] sm:$0xff] %v464
          %481 = vst [vmem:[%s269 + $0x20] sm:$0xff] %v465
          %482 = vst [vmem:[%s269 + $0x28] sm:$0xff] %v466
          %483 = vst [vmem:[%s269 + $0x30] sm:$0xff] %v467
          %484 = vst [vmem:[%s269 + $0x38] sm:$0xff] %v468
          %485 = vst [vmem:[%s269 + $0x40] sm:$0xff] %v469
          %486 = vst [vmem:[%s269 + $0x48] sm:$0xff] %v470
          %487 = vst [vmem:[%s269 + $0x50] sm:$0xff] %v471
          %488 = vst [vmem:[%s269 + $0x58] sm:$0xff] %v472
          %489 = vst [vmem:[%s269 + $0x60] sm:$0xff] %v473
          %490 = vst [vmem:[%s269 + $0x68] sm:$0xff] %v474
          %491 = vst [vmem:[%s269 + $0x70] sm:$0xff] %v475
          %492 = vst [vmem:[%s269 + $0x78] sm:$0xff] %v476
          %v493 = vld [vmem:[%s288] sm:$0xff]
          %v494 = vld [vmem:[%s288 + $0x8] sm:$0xff]
          %v495 = vld [vmem:[%s288 + $0x10] sm:$0xff]
          %v496 = vld [vmem:[%s288 + $0x18] sm:$0xff]
          %v497 = vld [vmem:[%s288 + $0x20] sm:$0xff]
          %v498 = vld [vmem:[%s288 + $0x28] sm:$0xff]
          %v499 = vld [vmem:[%s288 + $0x30] sm:$0xff]
          %v500 = vld [vmem:[%s288 + $0x38] sm:$0xff]
          %v501 = vld [vmem:[%s288 + $0x40] sm:$0xff]
          %v502 = vld [vmem:[%s288 + $0x48] sm:$0xff]
          %v503 = vld [vmem:[%s288 + $0x50] sm:$0xff]
          %v504 = vld [vmem:[%s288 + $0x58] sm:$0xff]
          %v505 = vld [vmem:[%s288 + $0x60] sm:$0xff]
          %v506 = vld [vmem:[%s288 + $0x68] sm:$0xff]
          %v507 = vld [vmem:[%s288 + $0x70] sm:$0xff]
          %v508 = vld [vmem:[%s288 + $0x78] sm:$0xff]
          %v509 = vadd.f32 %v493, %v461
          %v510 = vadd.f32 %v494, %v462
          %v511 = vadd.f32 %v495, %v463
          %v512 = vadd.f32 %v496, %v464
          %v513 = vadd.f32 %v497, %v465
          %v514 = vadd.f32 %v498, %v466
          %v515 = vadd.f32 %v499, %v467
          %v516 = vadd.f32 %v500, %v468
          %v517 = vadd.f32 %v501, %v469
          %v518 = vadd.f32 %v502, %v470
          %v519 = vadd.f32 %v503, %v471
          %v520 = vadd.f32 %v504, %v472
          %v521 = vadd.f32 %v505, %v473
          %v522 = vadd.f32 %v506, %v474
          %v523 = vadd.f32 %v507, %v475
          %v524 = vadd.f32 %v508, %v476
          %525 = vst [vmem:[%s276] sm:$0xff] %v509
          %526 = vst [vmem:[%s276 + $0x8] sm:$0xff] %v510
          %527 = vst [vmem:[%s276 + $0x10] sm:$0xff] %v511
          %528 = vst [vmem:[%s276 + $0x18] sm:$0xff] %v512
          %529 = vst [vmem:[%s276 + $0x20] sm:$0xff] %v513
          %530 = vst [vmem:[%s276 + $0x28] sm:$0xff] %v514
          %531 = vst [vmem:[%s276 + $0x30] sm:$0xff] %v515
          %532 = vst [vmem:[%s276 + $0x38] sm:$0xff] %v516
          %533 = vst [vmem:[%s276 + $0x40] sm:$0xff] %v517
          %534 = vst [vmem:[%s276 + $0x48] sm:$0xff] %v518
          %535 = vst [vmem:[%s276 + $0x50] sm:$0xff] %v519
          %536 = vst [vmem:[%s276 + $0x58] sm:$0xff] %v520
          %537 = vst [vmem:[%s276 + $0x60] sm:$0xff] %v521
          %538 = vst [vmem:[%s276 + $0x68] sm:$0xff] %v522
          %539 = vst [vmem:[%s276 + $0x70] sm:$0xff] %v523
          %540 = vst [vmem:[%s276 + $0x78] sm:$0xff] %v524
        $region44: #{_hyperconv_propagate.5} parent=31 // pred_fallthru
          _
        %s541 = sand.u32 %s125, 1
        %s542 = scalar_lea.sflag [#allocation5], %s541
        %s543 = sand.u32 %s125, 1
        %s544 = smul.addr %s543, 128
        %s545 = scalar_lea.vmem [#allocation6], %s544
        %s546 = sand.u32 %s151, 1
        %s547 = scalar_lea.sflag [#allocation8], %s546
        %s548 = sand.u32 %s151, 1
        %s549 = smul.addr %s548, 128
        %s550 = scalar_lea.vmem [#allocation7], %s549
        // Predicated region
        $region45: #{_hyperconv_propagate.5} parent=31 // pred_check
          %p551 = pneg %p135
        $region46: #{_hyperconv_propagate.5} parent=31 // pred_check_branch
          %553 = sbr.rel (%p551) target = $region48
        $region47: #{_hyperconv_propagate.5} parent=31 // pred_region
          %s554 = smul.u32 16, %s29
          %556 = vsyncadd %s542, 0
          %s557 = smul.addr %s554, 8
          %s558 = scalar_lea.hbm %s3, %s557
          %s559 = sshll.u32 %s545, 4
          %s560 = int_to_ptr.vmem [resolvable:$true] %s559
          %s561 = sshll.u32 %s558, 4
          %s562 = int_to_ptr.hbm [resolvable:$true] %s561
          %567 = dma.vmem_to_hbm [thread:$0]  %s560, 2048, %s562, %s542, 128, 128, 8
        $region48: #{_hyperconv_propagate.5} parent=31 // pred_fallthru
          _
        // Predicated region
        $region49: #{_hyperconv_propagate.5} parent=31 // pred_check
          %p568 = pneg %p161
        $region50: #{_hyperconv_propagate.5} parent=31 // pred_check_branch
          %570 = sbr.rel (%p568) target = $region52
        $region51: #{_hyperconv_propagate.5} parent=31 // pred_region
          %s571 = smul.u32 16, %s29
          %573 = vsyncadd %s547, 0
          %s574 = smul.addr %s571, 8
          %s575 = scalar_lea.hbm %s4, %s574
          %s576 = sshll.u32 %s550, 4
          %s577 = int_to_ptr.vmem [resolvable:$true] %s576
          %s578 = sshll.u32 %s575, 4
          %s579 = int_to_ptr.hbm [resolvable:$true] %s578
          %584 = dma.vmem_to_hbm [thread:$0]  %s577, 2048, %s579, %s547, 128, 128, 8
        $region52: #{_hyperconv_propagate.5} parent=31 // pred_fallthru
          _
      $region32: #{_hyperconv_propagate.5} parent=5 // pred_fallthru
        _
      %p585 = scmp.le.s32.totalorder 2, %s20
      // Predicated region
      $region53: #{_hyperconv_propagate.5} parent=5 // pred_check
        %p586 = pneg %p585
      $region54: #{_hyperconv_propagate.5} parent=5 // pred_check_branch
        %588 = sbr.rel (%p586) target = $region56
      $region55: #{_hyperconv_propagate.5} parent=5 // pred_region
        %s589 = ssub.s32 %s20, 2
        // Predicated region
        $region57: #{_hyperconv_propagate.5} parent=55 // pred_check
          %p590 = pneg %p141
        $region58: #{_hyperconv_propagate.5} parent=55 // pred_check_branch
          %592 = sbr.rel (%p590) target = $region60
        $region59: #{_hyperconv_propagate.5} parent=55 // pred_region
          %s593 = sand.u32 %s126, 1
          %s594 = scalar_lea.sflag [#allocation5], %s593
          %s595 = sand.u32 %s126, 1
          %s596 = smul.addr %s595, 128
          %s597 = scalar_lea.vmem [#allocation6], %s596
          %599 = dma.done %s594, 2048
        $region60: #{_hyperconv_propagate.5} parent=55 // pred_fallthru
          _
        // Predicated region
        $region61: #{_hyperconv_propagate.5} parent=55 // pred_check
          %p600 = pneg %p167
        $region62: #{_hyperconv_propagate.5} parent=55 // pred_check_branch
          %602 = sbr.rel (%p600) target = $region64
        $region63: #{_hyperconv_propagate.5} parent=55 // pred_region
          %s603 = sand.u32 %s152, 1
          %s604 = scalar_lea.sflag [#allocation8], %s603
          %s605 = sand.u32 %s152, 1
          %s606 = smul.addr %s605, 128
          %s607 = scalar_lea.vmem [#allocation7], %s606
          %609 = dma.done %s604, 2048
        $region64: #{_hyperconv_propagate.5} parent=55 // pred_fallthru
          _
      $region56: #{_hyperconv_propagate.5} parent=5 // pred_fallthru
        _
    $region6: #{_hyperconv_propagate.5} parent=1 // loop_footer
      %s24 = sadd.s32 1, %s20
    $region7: #{_hyperconv_propagate.5} parent=1 // loop_footer_branch
      %19 = sbr.rel target = $region3
    $region8: #{_hyperconv_propagate.5} parent=1 // loop_exit
      _
    %610 = vsyncpa [#allocation4], 1
    %s611 = scalar_lea.sflag [#allocation4], 1
    %612 = vsyncpa %s611, 1
    %613 = vsyncpa [#allocation5], 1
    %s614 = scalar_lea.sflag [#allocation5], 1
    %615 = vsyncpa %s614, 1
    %616 = vsyncpa [#allocation8], 1
    %s617 = scalar_lea.sflag [#allocation8], 1
    %618 = vsyncpa %s617, 1

</llo_original>
